<compile_context>
chip_gen: v7x
topology: tpu7x:2x2x1
jax: 0.10.0
libtpu: 0.0.40
codegen_flags: <defaults>
</compile_context>

<pallas_src>
import jax
import jax.numpy as jnp
from jax.experimental import pallas as pl
from jax.experimental.pallas import tpu as pltpu


def _image_model_kernel(x_ref, w_stem_ref, w_fc_ref, b_fc_ref,
                        logits_ref, emb_ref):
    # x_ref block: (B, Cin, HW) fp32 -- HW on the lane axis (lane-dense).
    x = x_ref[...]                       # (B, Cin, HW)
    w_stem = w_stem_ref[...]             # (Cin, F)
    B, cin, hw = x.shape
    F = w_stem.shape[1]

    # Stand-in backbone stem on the VPU: Cin (=3) unrolled broadcast FMAs.
    # feat[b, f, s] = sum_c x[b, c, s] * w_stem[c, f]
    feat = x[:, 0, None, :] * w_stem[0][None, :, None]          # (B, F, HW)
    for c in range(1, cin):
        feat = feat + x[:, c, None, :] * w_stem[c][None, :, None]
    feat = jnp.maximum(feat, 0.0)                                # ReLU

    # FastGlobalConcatPool2d: concat(global_avg, global_max) over HxW.
    avg = jnp.mean(feat, axis=-1)                                # (B, F)  lane reduce
    mx = jnp.max(feat, axis=-1)                                  # (B, F)  lane reduce
    emb = jnp.concatenate([avg, mx], axis=-1)                    # (B, 2F)

    # Lane-dense embedding store: zero-pad 2F -> emb_ref lane width (>=128).
    emb_pad = emb_ref.shape[1] - emb.shape[1]
    if emb_pad > 0:
        emb_out = jnp.concatenate(
            [emb, jnp.zeros((B, emb_pad), emb.dtype)], axis=-1)
    else:
        emb_out = emb
    emb_ref[...] = emb_out.astype(emb_ref.dtype)

    # MultiSampleDropoutFC in eval mode == Linear(2F -> classes) with bias.
    # w_fc / b_fc are zero-padded to 128 lanes on the class axis, so the store
    # below is a full unmasked (B, 128) slab.
    logits = jnp.dot(emb, w_fc_ref[...],
                     preferred_element_type=jnp.float32) + b_fc_ref[...]
    logits_ref[...] = logits.astype(logits_ref.dtype)


def image_model_forward(x_nchw, w_stem, w_fc, b_fc, *, batch_tile=8):
    """x_nchw: (N, Cin, H, W) fp32 -> (logits (N, classes), embedding (N, 2F))."""
    N, Cin, H, W = x_nchw.shape
    HW = H * W
    F = w_stem.shape[1]
    classes = w_fc.shape[1]
    emb_dim = 2 * F

    # Lane-dense (128-multiple) output widths.
    cls_pad = 128 * pl.cdiv(classes, 128)
    emb_pad = 128 * pl.cdiv(emb_dim, 128)

    # NCHW -> (N, Cin, HW): a pure reshape, HW lands on the lane axis.
    x_seq = x_nchw.reshape(N, Cin, HW)

    # Pad batch to a multiple of the batch tile (zero images are harmless:
    # ReLU(0)=0 so avg/max pools are 0; padded rows are sliced off below).
    B = batch_tile
    n_pad = (-N) % B
    if n_pad:
        x_seq = jnp.concatenate(
            [x_seq, jnp.zeros((n_pad, Cin, HW), x_seq.dtype)], axis=0)
    Np = N + n_pad

    # Zero-pad FC weight/bias along the class (lane) axis.
    w_fc_p = jnp.zeros((emb_dim, cls_pad), jnp.float32).at[:, :classes].set(w_fc)
    b_fc_p = jnp.zeros((1, cls_pad), jnp.float32).at[:, :classes].set(
        b_fc.reshape(1, classes))

    logits_p, emb_p = pl.pallas_call(
        _image_model_kernel,
        out_shape=(
            jax.ShapeDtypeStruct((Np, cls_pad), jnp.float32),
            jax.ShapeDtypeStruct((Np, emb_pad), jnp.float32),
        ),
        grid_spec=pltpu.PrefetchScalarGridSpec(
            num_scalar_prefetch=0,
            grid=(Np // B,),
            in_specs=[
                pl.BlockSpec((B, Cin, HW), lambda i: (i, 0, 0)),
                pl.BlockSpec((Cin, F), lambda i: (0, 0)),
                pl.BlockSpec((emb_dim, cls_pad), lambda i: (0, 0)),
                pl.BlockSpec((1, cls_pad), lambda i: (0, 0)),
            ],
            out_specs=[
                pl.BlockSpec((B, cls_pad), lambda i: (i, 0)),
                pl.BlockSpec((B, emb_pad), lambda i: (i, 0)),
            ],
        ),
        compiler_params=pltpu.CompilerParams(
            dimension_semantics=("parallel",)),
    )(x_seq, w_stem, w_fc_p, b_fc_p)

    # Slice away batch padding and lane padding.
    return logits_p[:N, :classes], emb_p[:N, :emb_dim]


def _reference(x_nchw, w_stem, w_fc, b_fc):
    # Pure-JAX reference for sanity checking.
    N, Cin, H, W = x_nchw.shape
    x_seq = jnp.transpose(x_nchw, (0, 2, 3, 1)).reshape(N, H * W, Cin)
    feat = jnp.maximum(jnp.einsum('nsc,cf->nsf', x_seq, w_stem), 0.0)
    emb = jnp.concatenate([feat.mean(axis=1), feat.max(axis=1)], axis=1)
    logits = emb @ w_fc + b_fc
    return logits, emb


if __name__ == "__main__":
    # Small shapes consistent with the forward: in_channel=3, spatial=16x16,
    # num_feature=32, classes=1.  Batch 16 -> 2 grid steps of 8 images each.
    N, Cin, H, W = 16, 3, 16, 16
    num_feature = 32
    classes = 1

    key = jax.random.PRNGKey(0)
    kx, kw1, kw2, kb = jax.random.split(key, 4)
    x = jax.random.normal(kx, (N, Cin, H, W), dtype=jnp.float32)
    w_stem = jax.random.normal(kw1, (Cin, num_feature), dtype=jnp.float32) * 0.1
    w_fc = jax.random.normal(kw2, (2 * num_feature, classes), dtype=jnp.float32) * 0.1
    b_fc = jax.random.normal(kb, (1, classes), dtype=jnp.float32) * 0.1

    logits, embedding = image_model_forward(x, w_stem, w_fc, b_fc)
    jax.block_until_ready((logits, embedding))

    ref_logits, ref_emb = _reference(x, w_stem, w_fc, b_fc)
    assert logits.shape == (N, classes)
    assert embedding.shape == (N, 2 * num_feature)
    assert jnp.allclose(logits, ref_logits, atol=1e-4, rtol=1e-4)
    assert jnp.allclose(embedding, ref_emb, atol=1e-4, rtol=1e-4)

    print("KERNEL_OK")
</pallas_src>

<mosaic_0001>
module attributes {stable_mosaic.version = 11 : i64} {
  func.func @_image_model_kernel(%arg0: i32, %arg1: memref<8x3x256xf32, #tpu.memory_space<vmem>>, %arg2: memref<3x32xf32, #tpu.memory_space<vmem>>, %arg3: memref<64x128xf32, #tpu.memory_space<vmem>>, %arg4: memref<1x128xf32, #tpu.memory_space<vmem>>, %arg5: memref<8x128xf32, #tpu.memory_space<vmem>>, %arg6: memref<8x128xf32, #tpu.memory_space<vmem>>) attributes {dimension_semantics = [#tpu.dimension_semantics<parallel>], iteration_bounds = array<i64: 2>, scalar_prefetch = 0 : i64, scratch_operands = 0 : i64, tpu.core_type = #tpu.core_type<tc>, window_params = [{transform_indices = @transform_0, window_bounds = array<i64: 8, 3, 256>}, {pipeline_mode = #tpu.pipeline_mode<synchronous>, transform_indices = @transform_1, window_bounds = array<i64: 3, 32>}, {pipeline_mode = #tpu.pipeline_mode<synchronous>, transform_indices = @transform_2, window_bounds = array<i64: 64, 128>}, {pipeline_mode = #tpu.pipeline_mode<synchronous>, transform_indices = @transform_3, window_bounds = array<i64: 1, 128>}, {transform_indices = @transform_4, window_bounds = array<i64: 8, 128>}, {transform_indices = @transform_5, window_bounds = array<i64: 8, 128>}]} {
    %c0 = arith.constant 0 : index
    %c0_0 = arith.constant 0 : index
    %c0_1 = arith.constant 0 : index
    %0 = vector.load %arg1[%c0, %c0_0, %c0_1] : memref<8x3x256xf32, #tpu.memory_space<vmem>>, vector<8x3x256xf32>
    %c0_2 = arith.constant 0 : index
    %c0_3 = arith.constant 0 : index
    %1 = vector.load %arg2[%c0_2, %c0_3] : memref<3x32xf32, #tpu.memory_space<vmem>>, vector<3x32xf32>
    %2 = vector.extract_strided_slice %0 {offsets = [0, 0, 0], sizes = [8, 1, 256], strides = [1, 1, 1]} : vector<8x3x256xf32> to vector<8x1x256xf32>
    %3 = vector.shape_cast %2 : vector<8x1x256xf32> to vector<8x256xf32>
    %4 = vector.shape_cast %3 : vector<8x256xf32> to vector<8x1x256xf32>
    %5 = vector.extract_strided_slice %1 {offsets = [0, 0], sizes = [1, 32], strides = [1, 1]} : vector<3x32xf32> to vector<1x32xf32>
    %6 = vector.shape_cast %5 : vector<1x32xf32> to vector<32xf32>
    %7 = vector.shape_cast %6 : vector<32xf32> to vector<1x32x1xf32>
    %8 = vector.broadcast %4 : vector<8x1x256xf32> to vector<8x32x256xf32>
    %9 = vector.broadcast %7 : vector<1x32x1xf32> to vector<8x32x256xf32>
    %10 = arith.mulf %8, %9 : vector<8x32x256xf32>
    %11 = vector.extract_strided_slice %0 {offsets = [0, 1, 0], sizes = [8, 1, 256], strides = [1, 1, 1]} : vector<8x3x256xf32> to vector<8x1x256xf32>
    %12 = vector.shape_cast %11 : vector<8x1x256xf32> to vector<8x256xf32>
    %13 = vector.shape_cast %12 : vector<8x256xf32> to vector<8x1x256xf32>
    %14 = vector.extract_strided_slice %1 {offsets = [1, 0], sizes = [1, 32], strides = [1, 1]} : vector<3x32xf32> to vector<1x32xf32>
    %15 = vector.shape_cast %14 : vector<1x32xf32> to vector<32xf32>
    %16 = vector.shape_cast %15 : vector<32xf32> to vector<1x32x1xf32>
    %17 = vector.broadcast %13 : vector<8x1x256xf32> to vector<8x32x256xf32>
    %18 = vector.broadcast %16 : vector<1x32x1xf32> to vector<8x32x256xf32>
    %19 = arith.mulf %17, %18 : vector<8x32x256xf32>
    %20 = arith.addf %10, %19 : vector<8x32x256xf32>
    %21 = vector.extract_strided_slice %0 {offsets = [0, 2, 0], sizes = [8, 1, 256], strides = [1, 1, 1]} : vector<8x3x256xf32> to vector<8x1x256xf32>
    %22 = vector.shape_cast %21 : vector<8x1x256xf32> to vector<8x256xf32>
    %23 = vector.shape_cast %22 : vector<8x256xf32> to vector<8x1x256xf32>
    %24 = vector.extract_strided_slice %1 {offsets = [2, 0], sizes = [1, 32], strides = [1, 1]} : vector<3x32xf32> to vector<1x32xf32>
    %25 = vector.shape_cast %24 : vector<1x32xf32> to vector<32xf32>
    %26 = vector.shape_cast %25 : vector<32xf32> to vector<1x32x1xf32>
    %27 = vector.broadcast %23 : vector<8x1x256xf32> to vector<8x32x256xf32>
    %28 = vector.broadcast %26 : vector<1x32x1xf32> to vector<8x32x256xf32>
    %29 = arith.mulf %27, %28 : vector<8x32x256xf32>
    %30 = arith.addf %20, %29 : vector<8x32x256xf32>
    %cst = arith.constant 0.000000e+00 : f32
    %31 = vector.broadcast %cst : f32 to vector<8x32x256xf32>
    %32 = arith.maximumf %30, %31 : vector<8x32x256xf32>
    %cst_4 = arith.constant dense<0.000000e+00> : vector<8x32xf32>
    %33 = vector.multi_reduction <add>, %32, %cst_4 [2] : vector<8x32x256xf32> to vector<8x32xf32>
    %cst_5 = arith.constant 2.560000e+02 : f32
    %34 = vector.broadcast %cst_5 : f32 to vector<8x32xf32>
    %35 = arith.divf %33, %34 : vector<8x32xf32>
    %cst_6 = arith.constant dense<0xFF800000> : vector<8x32xf32>
    %36 = vector.multi_reduction <maximumf>, %32, %cst_6 [2] : vector<8x32x256xf32> to vector<8x32xf32>
    %37 = tpu.concatenate %35, %36 in 1 : vector<8x32xf32>, vector<8x32xf32> -> vector<8x64xf32>
    %cst_7 = arith.constant 0.000000e+00 : f32
    %38 = vector.broadcast %cst_7 : f32 to vector<8x64xf32>
    %39 = tpu.concatenate %37, %38 in 1 : vector<8x64xf32>, vector<8x64xf32> -> vector<8x128xf32>
    %c0_8 = arith.constant 0 : index
    %c0_9 = arith.constant 0 : index
    %40 = vector.load %arg6[%c0_8, %c0_9] : memref<8x128xf32, #tpu.memory_space<vmem>>, vector<8x128xf32>
    tpu.vector_store %arg6[%c0_8, %c0_9], %39 {strides = array<i32>} : memref<8x128xf32, #tpu.memory_space<vmem>>, vector<8x128xf32>,
    %c0_10 = arith.constant 0 : index
    %c0_11 = arith.constant 0 : index
    %41 = vector.load %arg3[%c0_10, %c0_11] : memref<64x128xf32, #tpu.memory_space<vmem>>, vector<64x128xf32>
    %cst_12 = arith.constant dense<0.000000e+00> : vector<8x128xf32>
    %42 = tpu.matmul %37, %41, %cst_12 {dimension_numbers = #tpu.dot_dimension_numbers<[1], [0], [0], [1], [0, 0, 1, 1], [], []>} : vector<8x64xf32>, vector<64x128xf32>, vector<8x128xf32> -> vector<8x128xf32>
    %c0_13 = arith.constant 0 : index
    %c0_14 = arith.constant 0 : index
    %43 = vector.load %arg4[%c0_13, %c0_14] : memref<1x128xf32, #tpu.memory_space<vmem>>, vector<1x128xf32>
    %44 = vector.broadcast %43 : vector<1x128xf32> to vector<8x128xf32>
    %45 = arith.addf %42, %44 : vector<8x128xf32>
    %c0_15 = arith.constant 0 : index
    %c0_16 = arith.constant 0 : index
    %46 = vector.load %arg5[%c0_15, %c0_16] : memref<8x128xf32, #tpu.memory_space<vmem>>, vector<8x128xf32>
    tpu.vector_store %arg5[%c0_15, %c0_16], %45 {strides = array<i32>} : memref<8x128xf32, #tpu.memory_space<vmem>>, vector<8x128xf32>,
    return
  }
  func.func @transform_0(%arg0: i32) -> (i32, i32, i32) {
    %c0_i32 = arith.constant 0 : i32
    %c0_i32_0 = arith.constant 0 : i32
    %c0_i32_1 = arith.constant 0 : i32
    return %arg0, %c0_i32, %c0_i32_0 : i32, i32, i32
  }
  func.func @transform_1(%arg0: i32) -> (i32, i32) {
    %c0_i32 = arith.constant 0 : i32
    %c0_i32_0 = arith.constant 0 : i32
    %c0_i32_1 = arith.constant 0 : i32
    return %c0_i32, %c0_i32_0 : i32, i32
  }
  func.func @transform_2(%arg0: i32) -> (i32, i32) {
    %c0_i32 = arith.constant 0 : i32
    %c0_i32_0 = arith.constant 0 : i32
    %c0_i32_1 = arith.constant 0 : i32
    return %c0_i32, %c0_i32_0 : i32, i32
  }
  func.func @transform_3(%arg0: i32) -> (i32, i32) {
    %c0_i32 = arith.constant 0 : i32
    %c0_i32_0 = arith.constant 0 : i32
    %c0_i32_1 = arith.constant 0 : i32
    return %c0_i32, %c0_i32_0 : i32, i32
  }
  func.func @transform_4(%arg0: i32) -> (i32, i32) {
    %c0_i32 = arith.constant 0 : i32
    %c0_i32_0 = arith.constant 0 : i32
    return %arg0, %c0_i32 : i32, i32
  }
  func.func @transform_5(%arg0: i32) -> (i32, i32) {
    %c0_i32 = arith.constant 0 : i32
    %c0_i32_0 = arith.constant 0 : i32
    return %arg0, %c0_i32 : i32, i32
  }
}

</mosaic_0001>

<llo_original>
// kernel: tpu_custom_call.1
$region0: #{tpu_custom_call.1}
  #allocation0 [shape = 'u32[]', space=smem, size = 0x4, offset = 0x4, fixed_abs, tag = 'smem constant byte address 0x4 - core index']
  #allocation1 [shape = 'u32[144,128]{1,0:T(1,128)}', space=vmem, size = 0x12000, scoped, tag = 'internal scratch']
  %s0 = inlined_call_operand.vmem [shape: f32[16,3,256], index: 0, kind: input, shape index: {}]
  %s1 = inlined_call_operand.vmem [shape: f32[3,32], index: 1, kind: input, shape index: {}]
  %s2 = inlined_call_operand.vmem [shape: f32[64,128], index: 2, kind: input, shape index: {}]
  %s3 = inlined_call_operand.vmem [shape: f32[1,128], index: 3, kind: input, shape index: {}]
  %s4 = inlined_call_operand.hbm [shape: f32[16,128], index: 4, kind: output, shape index: {0}]
  %s5 = inlined_call_operand.hbm [shape: f32[16,128], index: 5, kind: output, shape index: {1}]
  %6 = xla_tuple %s4, %s5
  %s7 = sld [smem:[#allocation0]]
  $region57: #{tpu_custom_call.1} parent=0
    _
  %s9 = ssub.s32 1, %s7
  %s10 = scalar_select 0, %s9, %s7
  $region1: #{tpu_custom_call.1} parent=0
    #allocation2 [shape = 'u8[8192]{0}', space=vmem, size = 0x2000, scoped, tag = 'output window, operand 0']
    #allocation3 [shape = 's32[2]{0}', space=sflag, size = 0x8, scoped, tag = 'scoped memory for tpu_custom_call.1']
    #allocation4 [shape = 'u8[8192]{0}', space=vmem, size = 0x2000, scoped, tag = 'output window, operand 1']
    #allocation5 [shape = 's32[2]{0}', space=sflag, size = 0x8, scoped, tag = 'scoped memory for tpu_custom_call.1']
    %11 = vsyncpa [#allocation3], 0
    %s12 = scalar_lea.sflag [#allocation3], 1
    %13 = vsyncpa %s12, 0
    %14 = vsyncpa [#allocation5], 0
    %s15 = scalar_lea.sflag [#allocation5], 1
    %16 = vsyncpa %s15, 0
    loop: start=0, step=1, limit=4
    $region2: #{tpu_custom_call.1} parent=1 // loop_pre_header
      _
    $region3: #{tpu_custom_call.1} parent=1 // loop_header
      %s18 = sphi 0, %s22
      %p19 = scmp.ge.s32.totalorder %s18, 4
      %s28 = sphi 0, %s30
      %s31 = sphi 0, %s28
      %s32 = sphi 0, %s31
      %s48 = sphi 0, %s32
      %s52 = sphi 0, %s52
      %s54 = sphi 0, %s52
      %s55 = sphi 0, %s54
      %s69 = sphi 0, %s55
      %s73 = sphi 0, %s73
      %s75 = sphi 0, %s73
      %s76 = sphi 0, %s75
      %s90 = sphi 0, %s76
      %s94 = sphi 0, %s94
      %s96 = sphi 0, %s94
      %s97 = sphi 0, %s96
      %s111 = sphi 0, %s97
      %s117 = sphi 0, %s119
      %s120 = sphi 0, %s117
      %s121 = sphi 0, %s120
      %s137 = sphi 0, %s121
      %s143 = sphi 0, %s145
      %s146 = sphi 0, %s143
      %s147 = sphi 0, %s146
      %s163 = sphi 0, %s147
    $region4: #{tpu_custom_call.1} parent=1 // loop_header_branch
      %21 = sbr.rel (%p19) target = $region8
    $region5: #{tpu_custom_call.1} parent=1 // loop_body
      %s23 = ssub.s32 %s18, 1
      %s24 = ssub.s32 %s18, 2
      %s25 = sadd.s32 %s18, 1
      %s26 = ssub.s32 %s18, %s25
      %p27 = scmp.eq.s32.totalorder %s26, 0
      %s29 = sadd.s32 %s28, 1
      %s30 = scalar_select %p27, %s28, %s29
      %p33 = pneg %p27
      %p34 = scmp.eq.s32.totalorder %s18, 1
      %p35 = por %p33, %p34
      %p36 = scmp.ne.s32.totalorder %s28, %s31
      %p37 = scmp.eq.s32.totalorder %s18, 0
      %p38 = por %p36, %p37
      %p39 = scmp.ne.s32.totalorder %s28, %s31
      %p40 = scmp.eq.s32.totalorder %s23, 1
      %p41 = por %p39, %p40
      %p42 = scmp.ne.s32.totalorder %s31, %s32
      %p43 = scmp.eq.s32.totalorder %s23, 0
      %p44 = por %p42, %p43
      %p45 = scmp.ne.s32.totalorder %s31, %s32
      %p46 = scmp.eq.s32.totalorder %s24, 1
      %p47 = por %p45, %p46
      %p49 = scmp.ne.s32.totalorder %s32, %s48
      %p50 = scmp.eq.s32.totalorder %s24, 0
      %p51 = por %p49, %p50
      %s53 = sadd.s32 %s52, 1
      %p56 = scmp.eq.s32.totalorder %s18, 1
      %p57 = scmp.ne.s32.totalorder %s52, %s54
      %p58 = scmp.eq.s32.totalorder %s18, 0
      %p59 = por %p57, %p58
      %p60 = scmp.ne.s32.totalorder %s52, %s54
      %p61 = scmp.eq.s32.totalorder %s23, 1
      %p62 = por %p60, %p61
      %p63 = scmp.ne.s32.totalorder %s54, %s55
      %p64 = scmp.eq.s32.totalorder %s23, 0
      %p65 = por %p63, %p64
      %p66 = scmp.ne.s32.totalorder %s54, %s55
      %p67 = scmp.eq.s32.totalorder %s24, 1
      %p68 = por %p66, %p67
      %p70 = scmp.ne.s32.totalorder %s55, %s69
      %p71 = scmp.eq.s32.totalorder %s24, 0
      %p72 = por %p70, %p71
      %s74 = sadd.s32 %s73, 1
      %p77 = scmp.eq.s32.totalorder %s18, 1
      %p78 = scmp.ne.s32.totalorder %s73, %s75
      %p79 = scmp.eq.s32.totalorder %s18, 0
      %p80 = por %p78, %p79
      %p81 = scmp.ne.s32.totalorder %s73, %s75
      %p82 = scmp.eq.s32.totalorder %s23, 1
      %p83 = por %p81, %p82
      %p84 = scmp.ne.s32.totalorder %s75, %s76
      %p85 = scmp.eq.s32.totalorder %s23, 0
      %p86 = por %p84, %p85
      %p87 = scmp.ne.s32.totalorder %s75, %s76
      %p88 = scmp.eq.s32.totalorder %s24, 1
      %p89 = por %p87, %p88
      %p91 = scmp.ne.s32.totalorder %s76, %s90
      %p92 = scmp.eq.s32.totalorder %s24, 0
      %p93 = por %p91, %p92
      %s95 = sadd.s32 %s94, 1
      %p98 = scmp.eq.s32.totalorder %s18, 1
      %p99 = scmp.ne.s32.totalorder %s94, %s96
      %p100 = scmp.eq.s32.totalorder %s18, 0
      %p101 = por %p99, %p100
      %p102 = scmp.ne.s32.totalorder %s94, %s96
      %p103 = scmp.eq.s32.totalorder %s23, 1
      %p104 = por %p102, %p103
      %p105 = scmp.ne.s32.totalorder %s96, %s97
      %p106 = scmp.eq.s32.totalorder %s23, 0
      %p107 = por %p105, %p106
      %p108 = scmp.ne.s32.totalorder %s96, %s97
      %p109 = scmp.eq.s32.totalorder %s24, 1
      %p110 = por %p108, %p109
      %p112 = scmp.ne.s32.totalorder %s97, %s111
      %p113 = scmp.eq.s32.totalorder %s24, 0
      %p114 = por %p112, %p113
      %s115 = ssub.s32 %s18, %s25
      %p116 = scmp.eq.s32.totalorder %s115, 0
      %s118 = sadd.s32 %s117, 1
      %s119 = scalar_select %p116, %s117, %s118
      %p122 = pneg %p116
      %p123 = scmp.eq.s32.totalorder %s18, 1
      %p124 = por %p122, %p123
      %p125 = scmp.ne.s32.totalorder %s117, %s120
      %p126 = scmp.eq.s32.totalorder %s18, 0
      %p127 = por %p125, %p126
      %p128 = scmp.ne.s32.totalorder %s117, %s120
      %p129 = scmp.eq.s32.totalorder %s23, 1
      %p130 = por %p128, %p129
      %p131 = scmp.ne.s32.totalorder %s120, %s121
      %p132 = scmp.eq.s32.totalorder %s23, 0
      %p133 = por %p131, %p132
      %p134 = scmp.ne.s32.totalorder %s120, %s121
      %p135 = scmp.eq.s32.totalorder %s24, 1
      %p136 = por %p134, %p135
      %p138 = scmp.ne.s32.totalorder %s121, %s137
      %p139 = scmp.eq.s32.totalorder %s24, 0
      %p140 = por %p138, %p139
      %s141 = ssub.s32 %s18, %s25
      %p142 = scmp.eq.s32.totalorder %s141, 0
      %s144 = sadd.s32 %s143, 1
      %s145 = scalar_select %p142, %s143, %s144
      %p148 = pneg %p142
      %p149 = scmp.eq.s32.totalorder %s18, 1
      %p150 = por %p148, %p149
      %p151 = scmp.ne.s32.totalorder %s143, %s146
      %p152 = scmp.eq.s32.totalorder %s18, 0
      %p153 = por %p151, %p152
      %p154 = scmp.ne.s32.totalorder %s143, %s146
      %p155 = scmp.eq.s32.totalorder %s23, 1
      %p156 = por %p154, %p155
      %p157 = scmp.ne.s32.totalorder %s146, %s147
      %p158 = scmp.eq.s32.totalorder %s23, 0
      %p159 = por %p157, %p158
      %p160 = scmp.ne.s32.totalorder %s146, %s147
      %p161 = scmp.eq.s32.totalorder %s24, 1
      %p162 = por %p160, %p161
      %p164 = scmp.ne.s32.totalorder %s147, %s163
      %p165 = scmp.eq.s32.totalorder %s24, 0
      %p166 = por %p164, %p165
      %p167 = scmp.le.s32.totalorder 1, %s18
      %p168 = scmp.lt.s32.totalorder %s18, 3
      %p169 = pnand %p167, %p168
      %p170 = pneg %p169
      // Predicated region
      $region9: #{tpu_custom_call.1} parent=5 // pred_check
        _
      $region10: #{tpu_custom_call.1} parent=5 // pred_check_branch
        %172 = sbr.rel (%p169) target = $region12
      $region11: #{tpu_custom_call.1} parent=5 // pred_region
        %s173 = ssub.s32 %s18, 1
        // Predicated region
        $region13: #{tpu_custom_call.1} parent=11 // pred_check
          %p174 = pneg %p65
        $region14: #{tpu_custom_call.1} parent=11 // pred_check_branch
          %176 = sbr.rel (%p174) target = $region16
        $region15: #{tpu_custom_call.1} parent=11 // pred_region
          _
        $region16: #{tpu_custom_call.1} parent=11 // pred_fallthru
          _
        // Predicated region
        $region17: #{tpu_custom_call.1} parent=11 // pred_check
          %p177 = pneg %p86
        $region18: #{tpu_custom_call.1} parent=11 // pred_check_branch
          %179 = sbr.rel (%p177) target = $region20
        $region19: #{tpu_custom_call.1} parent=11 // pred_region
          _
        $region20: #{tpu_custom_call.1} parent=11 // pred_fallthru
          _
        // Predicated region
        $region21: #{tpu_custom_call.1} parent=11 // pred_check
          %p180 = pneg %p107
        $region22: #{tpu_custom_call.1} parent=11 // pred_check_branch
          %182 = sbr.rel (%p180) target = $region24
        $region23: #{tpu_custom_call.1} parent=11 // pred_region
          _
        $region24: #{tpu_custom_call.1} parent=11 // pred_fallthru
          _
      $region12: #{tpu_custom_call.1} parent=5 // pred_fallthru
        _
      %p183 = scmp.lt.s32.totalorder %s18, 2
      // Predicated region
      $region25: #{tpu_custom_call.1} parent=5 // pred_check
        %p184 = pneg %p183
      $region26: #{tpu_custom_call.1} parent=5 // pred_check_branch
        %186 = sbr.rel (%p184) target = $region28
      $region27: #{tpu_custom_call.1} parent=5 // pred_region
        // Predicated region
        $region29: #{tpu_custom_call.1} parent=27 // pred_check
          %p187 = pneg %p38
        $region30: #{tpu_custom_call.1} parent=27 // pred_check_branch
          %189 = sbr.rel (%p187) target = $region32
        $region31: #{tpu_custom_call.1} parent=27 // pred_region
          %s190 = smul.u32 8, %s18
          %p191 = scmp.lt.s32.totalorder %s190, 15
          %s192 = scalar_select %p191, %s190, 15
          %s193 = smul.addr %s192, 2
          %s194 = smul.addr %s193, 4
          %s195 = scalar_lea.vmem %s0, %s194
          %s196 = smul.u32 8, %s18
        $region32: #{tpu_custom_call.1} parent=27 // pred_fallthru
          _
      $region28: #{tpu_custom_call.1} parent=5 // pred_fallthru
        _
      %p197 = scmp.le.s32.totalorder 1, %s18
      %p198 = scmp.lt.s32.totalorder %s18, 3
      %p199 = pnand %p197, %p198
      %p200 = pneg %p199
      // Predicated region
      $region33: #{tpu_custom_call.1} parent=5 // pred_check
        _
      $region34: #{tpu_custom_call.1} parent=5 // pred_check_branch
        %202 = sbr.rel (%p199) target = $region36
      $region35: #{tpu_custom_call.1} parent=5 // pred_region
        %s203 = ssub.s32 %s18, 1
        %s204 = smul.u32 8, %s23
        %p205 = scmp.lt.s32.totalorder %s204, 15
        %s206 = scalar_select %p205, %s204, 15
        %s207 = smul.addr %s206, 2
        %s208 = smul.addr %s207, 4
        %s209 = scalar_lea.vmem %s0, %s208
        %p210 = pneg %p44
        %p211 = pneg %p41
        %p212 = pneg %p65
        %p213 = pneg %p62
        %p214 = pneg %p86
        %p215 = pneg %p83
        %p216 = pneg %p107
        %p217 = pneg %p104
        %p218 = pneg %p133
        %p219 = pneg %p130
        %s220 = sand.u32 %s120, 1
        %s221 = scalar_lea.sflag [#allocation3], %s220
        %s222 = sand.u32 %s120, 1
        %s223 = smul.addr %s222, 8
        %s224 = scalar_lea.vmem [#allocation2], %s223
        %p225 = pneg %p159
        %p226 = pneg %p156
        %s227 = sand.u32 %s146, 1
        %s228 = scalar_lea.sflag [#allocation5], %s227
        %s229 = sand.u32 %s146, 1
        %s230 = smul.addr %s229, 8
        %s231 = scalar_lea.vmem [#allocation4], %s230
        %s232 = smul.u32 8, %s23
        %p233 = scmp.lt.s32.totalorder %s232, 15
        %s234 = scalar_select %p233, %s232, 15
        %s235 = smul.addr %s234, 2
        %s236 = smul.addr %s235, 4
        %s237 = scalar_lea.vmem %s0, %s236
        %s238 = smul.u32 8, %s23
        %v239 = vld [vmem:[%s237] sm:$0x77]
        %v240 = vld [vmem:[%s237 + $0x8] sm:$0x77]
        %v241 = vld [vmem:[%s237 + $0x10] sm:$0x77]
        %v242 = vld [vmem:[%s237 + $0x18] sm:$0x77]
        %v243 = vld [vmem:[%s237 + $0x20] sm:$0x77]
        %v244 = vld [vmem:[%s237 + $0x28] sm:$0x77]
        %v245 = vld [vmem:[%s237 + $0x30] sm:$0x77]
        %v246 = vld [vmem:[%s237 + $0x38] sm:$0x77]
        %v247 = vld [vmem:[%s1] sm:$0x7]
        %v248 = vlaneseq
        %v249 = vshrl.u32 %v248, 7
        %v250 = vsub.s32 0, %v249
        %v251 = vrot.slane %v247, %v250
        %253 = vbcast.lane.b32.xlu0 %v251, 256
        %v254 = vpop.permute.xlu0 %253
        %s256 = sor.u32 256, 8
        %257 = vbcast.lane.b32.xlu0 %v251, %s256
        %v258 = vpop.permute.xlu0 %257
        %s260 = sor.u32 256, 16
        %261 = vbcast.lane.b32.xlu0 %v251, %s260
        %v262 = vpop.permute.xlu0 %261
        %s264 = sor.u32 256, 24
        %265 = vbcast.lane.b32.xlu0 %v251, %s264
        %v266 = vpop.permute.xlu0 %265
        %v275 = vlaneseq
        %v276 = vshrl.u32 %v275, 7
        %v277 = vsub.s32 0, %v276
        %v278 = vrot.slane %v239, %v277
        %v279 = vlaneseq
        %v280 = vshrl.u32 %v279, 7
        %v281 = vsub.s32 4, %v280
        %v282 = vrot.slane %v239, %v281
        %v283 = vlaneseq
        %v284 = vshrl.u32 %v283, 7
        %v285 = vsub.s32 0, %v284
        %v286 = vrot.slane %v240, %v285
        %v287 = vlaneseq
        %v288 = vshrl.u32 %v287, 7
        %v289 = vsub.s32 4, %v288
        %v290 = vrot.slane %v240, %v289
        %v291 = vlaneseq
        %v292 = vshrl.u32 %v291, 7
        %v293 = vsub.s32 0, %v292
        %v294 = vrot.slane %v241, %v293
        %v295 = vlaneseq
        %v296 = vshrl.u32 %v295, 7
        %v297 = vsub.s32 4, %v296
        %v298 = vrot.slane %v241, %v297
        %v299 = vlaneseq
        %v300 = vshrl.u32 %v299, 7
        %v301 = vsub.s32 0, %v300
        %v302 = vrot.slane %v242, %v301
        %v303 = vlaneseq
        %v304 = vshrl.u32 %v303, 7
        %v305 = vsub.s32 4, %v304
        %v306 = vrot.slane %v242, %v305
        %v307 = vlaneseq
        %v308 = vshrl.u32 %v307, 7
        %v309 = vsub.s32 0, %v308
        %v310 = vrot.slane %v243, %v309
        %v311 = vlaneseq
        %v312 = vshrl.u32 %v311, 7
        %v313 = vsub.s32 4, %v312
        %v314 = vrot.slane %v243, %v313
        %v315 = vlaneseq
        %v316 = vshrl.u32 %v315, 7
        %v317 = vsub.s32 0, %v316
        %v318 = vrot.slane %v244, %v317
        %v319 = vlaneseq
        %v320 = vshrl.u32 %v319, 7
        %v321 = vsub.s32 4, %v320
        %v322 = vrot.slane %v244, %v321
        %v323 = vlaneseq
        %v324 = vshrl.u32 %v323, 7
        %v325 = vsub.s32 0, %v324
        %v326 = vrot.slane %v245, %v325
        %v327 = vlaneseq
        %v328 = vshrl.u32 %v327, 7
        %v329 = vsub.s32 4, %v328
        %v330 = vrot.slane %v245, %v329
        %v331 = vlaneseq
        %v332 = vshrl.u32 %v331, 7
        %v333 = vsub.s32 0, %v332
        %v334 = vrot.slane %v246, %v333
        %v335 = vlaneseq
        %v336 = vshrl.u32 %v335, 7
        %v337 = vsub.s32 4, %v336
        %v338 = vrot.slane %v246, %v337
        %v355 = vlaneseq
        %v356 = vshrl.u32 %v355, 7
        %v357 = vsub.s32 0, %v356
        %v358 = vrot.slane %v278, %v357
        %v359 = vlaneseq
        %v360 = vshrl.u32 %v359, 7
        %v361 = vsub.s32 0, %v360
        %v362 = vrot.slane %v282, %v361
        %v363 = vlaneseq
        %v364 = vshrl.u32 %v363, 7
        %v365 = vsub.s32 0, %v364
        %v366 = vrot.slane %v286, %v365
        %v367 = vlaneseq
        %v368 = vshrl.u32 %v367, 7
        %v369 = vsub.s32 0, %v368
        %v370 = vrot.slane %v290, %v369
        %v371 = vlaneseq
        %v372 = vshrl.u32 %v371, 7
        %v373 = vsub.s32 0, %v372
        %v374 = vrot.slane %v294, %v373
        %v375 = vlaneseq
        %v376 = vshrl.u32 %v375, 7
        %v377 = vsub.s32 0, %v376
        %v378 = vrot.slane %v298, %v377
        %v379 = vlaneseq
        %v380 = vshrl.u32 %v379, 7
        %v381 = vsub.s32 0, %v380
        %v382 = vrot.slane %v302, %v381
        %v383 = vlaneseq
        %v384 = vshrl.u32 %v383, 7
        %v385 = vsub.s32 0, %v384
        %v386 = vrot.slane %v306, %v385
        %v387 = vlaneseq
        %v388 = vshrl.u32 %v387, 7
        %v389 = vsub.s32 0, %v388
        %v390 = vrot.slane %v310, %v389
        %v391 = vlaneseq
        %v392 = vshrl.u32 %v391, 7
        %v393 = vsub.s32 0, %v392
        %v394 = vrot.slane %v314, %v393
        %v395 = vlaneseq
        %v396 = vshrl.u32 %v395, 7
        %v397 = vsub.s32 0, %v396
        %v398 = vrot.slane %v318, %v397
        %v399 = vlaneseq
        %v400 = vshrl.u32 %v399, 7
        %v401 = vsub.s32 0, %v400
        %v402 = vrot.slane %v322, %v401
        %v403 = vlaneseq
        %v404 = vshrl.u32 %v403, 7
        %v405 = vsub.s32 0, %v404
        %v406 = vrot.slane %v326, %v405
        %v407 = vlaneseq
        %v408 = vshrl.u32 %v407, 7
        %v409 = vsub.s32 0, %v408
        %v410 = vrot.slane %v330, %v409
        %v411 = vlaneseq
        %v412 = vshrl.u32 %v411, 7
        %v413 = vsub.s32 0, %v412
        %v414 = vrot.slane %v334, %v413
        %v415 = vlaneseq
        %v416 = vshrl.u32 %v415, 7
        %v417 = vsub.s32 0, %v416
        %v418 = vrot.slane %v338, %v417
        %v419 = vmul.f32 %v358, %v254
        %v420 = vmul.f32 %v362, %v254
        %v421 = vmul.f32 %v358, %v258
        %v422 = vmul.f32 %v362, %v258
        %v423 = vmul.f32 %v358, %v262
        %v424 = vmul.f32 %v362, %v262
        %v425 = vmul.f32 %v358, %v266
        %v426 = vmul.f32 %v362, %v266
        %v427 = vmul.f32 %v366, %v254
        %v428 = vmul.f32 %v370, %v254
        %v429 = vmul.f32 %v366, %v258
        %v430 = vmul.f32 %v370, %v258
        %v431 = vmul.f32 %v366, %v262
        %v432 = vmul.f32 %v370, %v262
        %v433 = vmul.f32 %v366, %v266
        %v434 = vmul.f32 %v370, %v266
        %v435 = vmul.f32 %v374, %v254
        %v436 = vmul.f32 %v378, %v254
        %v437 = vmul.f32 %v374, %v258
        %v438 = vmul.f32 %v378, %v258
        %v439 = vmul.f32 %v374, %v262
        %v440 = vmul.f32 %v378, %v262
        %v441 = vmul.f32 %v374, %v266
        %v442 = vmul.f32 %v378, %v266
        %v443 = vmul.f32 %v382, %v254
        %v444 = vmul.f32 %v386, %v254
        %v445 = vmul.f32 %v382, %v258
        %v446 = vmul.f32 %v386, %v258
        %v447 = vmul.f32 %v382, %v262
        %v448 = vmul.f32 %v386, %v262
        %v449 = vmul.f32 %v382, %v266
        %v450 = vmul.f32 %v386, %v266
        %v451 = vmul.f32 %v390, %v254
        %v452 = vmul.f32 %v394, %v254
        %v453 = vmul.f32 %v390, %v258
        %v454 = vmul.f32 %v394, %v258
        %v455 = vmul.f32 %v390, %v262
        %v456 = vmul.f32 %v394, %v262
        %v457 = vmul.f32 %v390, %v266
        %v458 = vmul.f32 %v394, %v266
        %v459 = vmul.f32 %v398, %v254
        %v460 = vmul.f32 %v402, %v254
        %v461 = vmul.f32 %v398, %v258
        %v462 = vmul.f32 %v402, %v258
        %v463 = vmul.f32 %v398, %v262
        %v464 = vmul.f32 %v402, %v262
        %v465 = vmul.f32 %v398, %v266
        %v466 = vmul.f32 %v402, %v266
        %v467 = vmul.f32 %v406, %v254
        %v468 = vmul.f32 %v410, %v254
        %v469 = vmul.f32 %v406, %v258
        %v470 = vmul.f32 %v410, %v258
        %v471 = vmul.f32 %v406, %v262
        %v472 = vmul.f32 %v410, %v262
        %v473 = vmul.f32 %v406, %v266
        %v474 = vmul.f32 %v410, %v266
        %v475 = vmul.f32 %v414, %v254
        %v476 = vmul.f32 %v418, %v254
        %v477 = vmul.f32 %v414, %v258
        %v478 = vmul.f32 %v418, %v258
        %v479 = vmul.f32 %v414, %v262
        %v480 = vmul.f32 %v418, %v262
        %v481 = vmul.f32 %v414, %v266
        %v482 = vmul.f32 %v418, %v266
        %v483 = vlaneseq
        %v484 = vshrl.u32 %v483, 7
        %v485 = vsub.s32 1, %v484
        %v486 = vrot.slane %v247, %v485
        %488 = vbcast.lane.b32.xlu0 %v486, 256
        %v489 = vpop.permute.xlu0 %488
        %s491 = sor.u32 256, 8
        %492 = vbcast.lane.b32.xlu0 %v486, %s491
        %v493 = vpop.permute.xlu0 %492
        %s495 = sor.u32 256, 16
        %496 = vbcast.lane.b32.xlu0 %v486, %s495
        %v497 = vpop.permute.xlu0 %496
        %s499 = sor.u32 256, 24
        %500 = vbcast.lane.b32.xlu0 %v486, %s499
        %v501 = vpop.permute.xlu0 %500
        %v502 = vlaneseq
        %v503 = vshrl.u32 %v502, 7
        %v504 = vsub.s32 1, %v503
        %v505 = vrot.slane %v239, %v504
        %v506 = vlaneseq
        %v507 = vshrl.u32 %v506, 7
        %v508 = vsub.s32 5, %v507
        %v509 = vrot.slane %v239, %v508
        %v510 = vlaneseq
        %v511 = vshrl.u32 %v510, 7
        %v512 = vsub.s32 1, %v511
        %v513 = vrot.slane %v240, %v512
        %v514 = vlaneseq
        %v515 = vshrl.u32 %v514, 7
        %v516 = vsub.s32 5, %v515
        %v517 = vrot.slane %v240, %v516
        %v518 = vlaneseq
        %v519 = vshrl.u32 %v518, 7
        %v520 = vsub.s32 1, %v519
        %v521 = vrot.slane %v241, %v520
        %v522 = vlaneseq
        %v523 = vshrl.u32 %v522, 7
        %v524 = vsub.s32 5, %v523
        %v525 = vrot.slane %v241, %v524
        %v526 = vlaneseq
        %v527 = vshrl.u32 %v526, 7
        %v528 = vsub.s32 1, %v527
        %v529 = vrot.slane %v242, %v528
        %v530 = vlaneseq
        %v531 = vshrl.u32 %v530, 7
        %v532 = vsub.s32 5, %v531
        %v533 = vrot.slane %v242, %v532
        %v534 = vlaneseq
        %v535 = vshrl.u32 %v534, 7
        %v536 = vsub.s32 1, %v535
        %v537 = vrot.slane %v243, %v536
        %v538 = vlaneseq
        %v539 = vshrl.u32 %v538, 7
        %v540 = vsub.s32 5, %v539
        %v541 = vrot.slane %v243, %v540
        %v542 = vlaneseq
        %v543 = vshrl.u32 %v542, 7
        %v544 = vsub.s32 1, %v543
        %v545 = vrot.slane %v244, %v544
        %v546 = vlaneseq
        %v547 = vshrl.u32 %v546, 7
        %v548 = vsub.s32 5, %v547
        %v549 = vrot.slane %v244, %v548
        %v550 = vlaneseq
        %v551 = vshrl.u32 %v550, 7
        %v552 = vsub.s32 1, %v551
        %v553 = vrot.slane %v245, %v552
        %v554 = vlaneseq
        %v555 = vshrl.u32 %v554, 7
        %v556 = vsub.s32 5, %v555
        %v557 = vrot.slane %v245, %v556
        %v558 = vlaneseq
        %v559 = vshrl.u32 %v558, 7
        %v560 = vsub.s32 1, %v559
        %v561 = vrot.slane %v246, %v560
        %v562 = vlaneseq
        %v563 = vshrl.u32 %v562, 7
        %v564 = vsub.s32 5, %v563
        %v565 = vrot.slane %v246, %v564
        %v582 = vlaneseq
        %v583 = vshrl.u32 %v582, 7
        %v584 = vsub.s32 1, %v583
        %v585 = vrot.slane %v505, %v584
        %v586 = vlaneseq
        %v587 = vshrl.u32 %v586, 7
        %v588 = vsub.s32 1, %v587
        %v589 = vrot.slane %v509, %v588
        %v590 = vlaneseq
        %v591 = vshrl.u32 %v590, 7
        %v592 = vsub.s32 1, %v591
        %v593 = vrot.slane %v513, %v592
        %v594 = vlaneseq
        %v595 = vshrl.u32 %v594, 7
        %v596 = vsub.s32 1, %v595
        %v597 = vrot.slane %v517, %v596
        %v598 = vlaneseq
        %v599 = vshrl.u32 %v598, 7
        %v600 = vsub.s32 1, %v599
        %v601 = vrot.slane %v521, %v600
        %v602 = vlaneseq
        %v603 = vshrl.u32 %v602, 7
        %v604 = vsub.s32 1, %v603
        %v605 = vrot.slane %v525, %v604
        %v606 = vlaneseq
        %v607 = vshrl.u32 %v606, 7
        %v608 = vsub.s32 1, %v607
        %v609 = vrot.slane %v529, %v608
        %v610 = vlaneseq
        %v611 = vshrl.u32 %v610, 7
        %v612 = vsub.s32 1, %v611
        %v613 = vrot.slane %v533, %v612
        %v614 = vlaneseq
        %v615 = vshrl.u32 %v614, 7
        %v616 = vsub.s32 1, %v615
        %v617 = vrot.slane %v537, %v616
        %v618 = vlaneseq
        %v619 = vshrl.u32 %v618, 7
        %v620 = vsub.s32 1, %v619
        %v621 = vrot.slane %v541, %v620
        %v622 = vlaneseq
        %v623 = vshrl.u32 %v622, 7
        %v624 = vsub.s32 1, %v623
        %v625 = vrot.slane %v545, %v624
        %v626 = vlaneseq
        %v627 = vshrl.u32 %v626, 7
        %v628 = vsub.s32 1, %v627
        %v629 = vrot.slane %v549, %v628
        %v630 = vlaneseq
        %v631 = vshrl.u32 %v630, 7
        %v632 = vsub.s32 1, %v631
        %v633 = vrot.slane %v553, %v632
        %v634 = vlaneseq
        %v635 = vshrl.u32 %v634, 7
        %v636 = vsub.s32 1, %v635
        %v637 = vrot.slane %v557, %v636
        %v638 = vlaneseq
        %v639 = vshrl.u32 %v638, 7
        %v640 = vsub.s32 1, %v639
        %v641 = vrot.slane %v561, %v640
        %v642 = vlaneseq
        %v643 = vshrl.u32 %v642, 7
        %v644 = vsub.s32 1, %v643
        %v645 = vrot.slane %v565, %v644
        %v646 = vmul.f32 %v585, %v489
        %v647 = vmul.f32 %v589, %v489
        %v648 = vmul.f32 %v585, %v493
        %v649 = vmul.f32 %v589, %v493
        %v650 = vmul.f32 %v585, %v497
        %v651 = vmul.f32 %v589, %v497
        %v652 = vmul.f32 %v585, %v501
        %v653 = vmul.f32 %v589, %v501
        %v654 = vmul.f32 %v593, %v489
        %v655 = vmul.f32 %v597, %v489
        %v656 = vmul.f32 %v593, %v493
        %v657 = vmul.f32 %v597, %v493
        %v658 = vmul.f32 %v593, %v497
        %v659 = vmul.f32 %v597, %v497
        %v660 = vmul.f32 %v593, %v501
        %v661 = vmul.f32 %v597, %v501
        %v662 = vmul.f32 %v601, %v489
        %v663 = vmul.f32 %v605, %v489
        %v664 = vmul.f32 %v601, %v493
        %v665 = vmul.f32 %v605, %v493
        %v666 = vmul.f32 %v601, %v497
        %v667 = vmul.f32 %v605, %v497
        %v668 = vmul.f32 %v601, %v501
        %v669 = vmul.f32 %v605, %v501
        %v670 = vmul.f32 %v609, %v489
        %v671 = vmul.f32 %v613, %v489
        %v672 = vmul.f32 %v609, %v493
        %v673 = vmul.f32 %v613, %v493
        %v674 = vmul.f32 %v609, %v497
        %v675 = vmul.f32 %v613, %v497
        %v676 = vmul.f32 %v609, %v501
        %v677 = vmul.f32 %v613, %v501
        %v678 = vmul.f32 %v617, %v489
        %v679 = vmul.f32 %v621, %v489
        %v680 = vmul.f32 %v617, %v493
        %v681 = vmul.f32 %v621, %v493
        %v682 = vmul.f32 %v617, %v497
        %v683 = vmul.f32 %v621, %v497
        %v684 = vmul.f32 %v617, %v501
        %v685 = vmul.f32 %v621, %v501
        %v686 = vmul.f32 %v625, %v489
        %v687 = vmul.f32 %v629, %v489
        %v688 = vmul.f32 %v625, %v493
        %v689 = vmul.f32 %v629, %v493
        %v690 = vmul.f32 %v625, %v497
        %v691 = vmul.f32 %v629, %v497
        %v692 = vmul.f32 %v625, %v501
        %v693 = vmul.f32 %v629, %v501
        %v694 = vmul.f32 %v633, %v489
        %v695 = vmul.f32 %v637, %v489
        %v696 = vmul.f32 %v633, %v493
        %v697 = vmul.f32 %v637, %v493
        %v698 = vmul.f32 %v633, %v497
        %v699 = vmul.f32 %v637, %v497
        %v700 = vmul.f32 %v633, %v501
        %v701 = vmul.f32 %v637, %v501
        %v702 = vmul.f32 %v641, %v489
        %v703 = vmul.f32 %v645, %v489
        %v704 = vmul.f32 %v641, %v493
        %v705 = vmul.f32 %v645, %v493
        %v706 = vmul.f32 %v641, %v497
        %v707 = vmul.f32 %v645, %v497
        %v708 = vmul.f32 %v641, %v501
        %v709 = vmul.f32 %v645, %v501
        %v710 = vadd.f32 %v419, %v646
        %v711 = vadd.f32 %v420, %v647
        %v712 = vadd.f32 %v421, %v648
        %v713 = vadd.f32 %v422, %v649
        %v714 = vadd.f32 %v423, %v650
        %v715 = vadd.f32 %v424, %v651
        %v716 = vadd.f32 %v425, %v652
        %v717 = vadd.f32 %v426, %v653
        %v718 = vadd.f32 %v427, %v654
        %v719 = vadd.f32 %v428, %v655
        %v720 = vadd.f32 %v429, %v656
        %v721 = vadd.f32 %v430, %v657
        %v722 = vadd.f32 %v431, %v658
        %v723 = vadd.f32 %v432, %v659
        %v724 = vadd.f32 %v433, %v660
        %v725 = vadd.f32 %v434, %v661
        %v726 = vadd.f32 %v435, %v662
        %v727 = vadd.f32 %v436, %v663
        %v728 = vadd.f32 %v437, %v664
        %v729 = vadd.f32 %v438, %v665
        %v730 = vadd.f32 %v439, %v666
        %v731 = vadd.f32 %v440, %v667
        %v732 = vadd.f32 %v441, %v668
        %v733 = vadd.f32 %v442, %v669
        %v734 = vadd.f32 %v443, %v670
        %v735 = vadd.f32 %v444, %v671
        %v736 = vadd.f32 %v445, %v672
        %v737 = vadd.f32 %v446, %v673
        %v738 = vadd.f32 %v447, %v674
        %v739 = vadd.f32 %v448, %v675
        %v740 = vadd.f32 %v449, %v676
        %v741 = vadd.f32 %v450, %v677
        %v742 = vadd.f32 %v451, %v678
        %v743 = vadd.f32 %v452, %v679
        %v744 = vadd.f32 %v453, %v680
        %v745 = vadd.f32 %v454, %v681
        %v746 = vadd.f32 %v455, %v682
        %v747 = vadd.f32 %v456, %v683
        %v748 = vadd.f32 %v457, %v684
        %v749 = vadd.f32 %v458, %v685
        %v750 = vadd.f32 %v459, %v686
        %v751 = vadd.f32 %v460, %v687
        %v752 = vadd.f32 %v461, %v688
        %v753 = vadd.f32 %v462, %v689
        %v754 = vadd.f32 %v463, %v690
        %v755 = vadd.f32 %v464, %v691
        %v756 = vadd.f32 %v465, %v692
        %v757 = vadd.f32 %v466, %v693
        %v758 = vadd.f32 %v467, %v694
        %v759 = vadd.f32 %v468, %v695
        %v760 = vadd.f32 %v469, %v696
        %v761 = vadd.f32 %v470, %v697
        %v762 = vadd.f32 %v471, %v698
        %v763 = vadd.f32 %v472, %v699
        %v764 = vadd.f32 %v473, %v700
        %v765 = vadd.f32 %v474, %v701
        %v766 = vadd.f32 %v475, %v702
        %v767 = vadd.f32 %v476, %v703
        %v768 = vadd.f32 %v477, %v704
        %v769 = vadd.f32 %v478, %v705
        %v770 = vadd.f32 %v479, %v706
        %v771 = vadd.f32 %v480, %v707
        %v772 = vadd.f32 %v481, %v708
        %v773 = vadd.f32 %v482, %v709
        %v774 = vlaneseq
        %v775 = vshrl.u32 %v774, 7
        %v776 = vsub.s32 2, %v775
        %v777 = vrot.slane %v247, %v776
        %779 = vbcast.lane.b32.xlu0 %v777, 256
        %v780 = vpop.permute.xlu0 %779
        %s782 = sor.u32 256, 8
        %783 = vbcast.lane.b32.xlu0 %v777, %s782
        %v784 = vpop.permute.xlu0 %783
        %s786 = sor.u32 256, 16
        %787 = vbcast.lane.b32.xlu0 %v777, %s786
        %v788 = vpop.permute.xlu0 %787
        %s790 = sor.u32 256, 24
        %791 = vbcast.lane.b32.xlu0 %v777, %s790
        %v792 = vpop.permute.xlu0 %791
        %v793 = vlaneseq
        %v794 = vshrl.u32 %v793, 7
        %v795 = vsub.s32 2, %v794
        %v796 = vrot.slane %v239, %v795
        %v797 = vlaneseq
        %v798 = vshrl.u32 %v797, 7
        %v799 = vsub.s32 6, %v798
        %v800 = vrot.slane %v239, %v799
        %v801 = vlaneseq
        %v802 = vshrl.u32 %v801, 7
        %v803 = vsub.s32 2, %v802
        %v804 = vrot.slane %v240, %v803
        %v805 = vlaneseq
        %v806 = vshrl.u32 %v805, 7
        %v807 = vsub.s32 6, %v806
        %v808 = vrot.slane %v240, %v807
        %v809 = vlaneseq
        %v810 = vshrl.u32 %v809, 7
        %v811 = vsub.s32 2, %v810
        %v812 = vrot.slane %v241, %v811
        %v813 = vlaneseq
        %v814 = vshrl.u32 %v813, 7
        %v815 = vsub.s32 6, %v814
        %v816 = vrot.slane %v241, %v815
        %v817 = vlaneseq
        %v818 = vshrl.u32 %v817, 7
        %v819 = vsub.s32 2, %v818
        %v820 = vrot.slane %v242, %v819
        %v821 = vlaneseq
        %v822 = vshrl.u32 %v821, 7
        %v823 = vsub.s32 6, %v822
        %v824 = vrot.slane %v242, %v823
        %v825 = vlaneseq
        %v826 = vshrl.u32 %v825, 7
        %v827 = vsub.s32 2, %v826
        %v828 = vrot.slane %v243, %v827
        %v829 = vlaneseq
        %v830 = vshrl.u32 %v829, 7
        %v831 = vsub.s32 6, %v830
        %v832 = vrot.slane %v243, %v831
        %v833 = vlaneseq
        %v834 = vshrl.u32 %v833, 7
        %v835 = vsub.s32 2, %v834
        %v836 = vrot.slane %v244, %v835
        %v837 = vlaneseq
        %v838 = vshrl.u32 %v837, 7
        %v839 = vsub.s32 6, %v838
        %v840 = vrot.slane %v244, %v839
        %v841 = vlaneseq
        %v842 = vshrl.u32 %v841, 7
        %v843 = vsub.s32 2, %v842
        %v844 = vrot.slane %v245, %v843
        %v845 = vlaneseq
        %v846 = vshrl.u32 %v845, 7
        %v847 = vsub.s32 6, %v846
        %v848 = vrot.slane %v245, %v847
        %v849 = vlaneseq
        %v850 = vshrl.u32 %v849, 7
        %v851 = vsub.s32 2, %v850
        %v852 = vrot.slane %v246, %v851
        %v853 = vlaneseq
        %v854 = vshrl.u32 %v853, 7
        %v855 = vsub.s32 6, %v854
        %v856 = vrot.slane %v246, %v855
        %v873 = vlaneseq
        %v874 = vshrl.u32 %v873, 7
        %v875 = vsub.s32 2, %v874
        %v876 = vrot.slane %v796, %v875
        %v877 = vlaneseq
        %v878 = vshrl.u32 %v877, 7
        %v879 = vsub.s32 2, %v878
        %v880 = vrot.slane %v800, %v879
        %v881 = vlaneseq
        %v882 = vshrl.u32 %v881, 7
        %v883 = vsub.s32 2, %v882
        %v884 = vrot.slane %v804, %v883
        %v885 = vlaneseq
        %v886 = vshrl.u32 %v885, 7
        %v887 = vsub.s32 2, %v886
        %v888 = vrot.slane %v808, %v887
        %v889 = vlaneseq
        %v890 = vshrl.u32 %v889, 7
        %v891 = vsub.s32 2, %v890
        %v892 = vrot.slane %v812, %v891
        %v893 = vlaneseq
        %v894 = vshrl.u32 %v893, 7
        %v895 = vsub.s32 2, %v894
        %v896 = vrot.slane %v816, %v895
        %v897 = vlaneseq
        %v898 = vshrl.u32 %v897, 7
        %v899 = vsub.s32 2, %v898
        %v900 = vrot.slane %v820, %v899
        %v901 = vlaneseq
        %v902 = vshrl.u32 %v901, 7
        %v903 = vsub.s32 2, %v902
        %v904 = vrot.slane %v824, %v903
        %v905 = vlaneseq
        %v906 = vshrl.u32 %v905, 7
        %v907 = vsub.s32 2, %v906
        %v908 = vrot.slane %v828, %v907
        %v909 = vlaneseq
        %v910 = vshrl.u32 %v909, 7
        %v911 = vsub.s32 2, %v910
        %v912 = vrot.slane %v832, %v911
        %v913 = vlaneseq
        %v914 = vshrl.u32 %v913, 7
        %v915 = vsub.s32 2, %v914
        %v916 = vrot.slane %v836, %v915
        %v917 = vlaneseq
        %v918 = vshrl.u32 %v917, 7
        %v919 = vsub.s32 2, %v918
        %v920 = vrot.slane %v840, %v919
        %v921 = vlaneseq
        %v922 = vshrl.u32 %v921, 7
        %v923 = vsub.s32 2, %v922
        %v924 = vrot.slane %v844, %v923
        %v925 = vlaneseq
        %v926 = vshrl.u32 %v925, 7
        %v927 = vsub.s32 2, %v926
        %v928 = vrot.slane %v848, %v927
        %v929 = vlaneseq
        %v930 = vshrl.u32 %v929, 7
        %v931 = vsub.s32 2, %v930
        %v932 = vrot.slane %v852, %v931
        %v933 = vlaneseq
        %v934 = vshrl.u32 %v933, 7
        %v935 = vsub.s32 2, %v934
        %v936 = vrot.slane %v856, %v935
        %v937 = vmul.f32 %v876, %v780
        %v938 = vmul.f32 %v880, %v780
        %v939 = vmul.f32 %v876, %v784
        %v940 = vmul.f32 %v880, %v784
        %v941 = vmul.f32 %v876, %v788
        %v942 = vmul.f32 %v880, %v788
        %v943 = vmul.f32 %v876, %v792
        %v944 = vmul.f32 %v880, %v792
        %v945 = vmul.f32 %v884, %v780
        %v946 = vmul.f32 %v888, %v780
        %v947 = vmul.f32 %v884, %v784
        %v948 = vmul.f32 %v888, %v784
        %v949 = vmul.f32 %v884, %v788
        %v950 = vmul.f32 %v888, %v788
        %v951 = vmul.f32 %v884, %v792
        %v952 = vmul.f32 %v888, %v792
        %v953 = vmul.f32 %v892, %v780
        %v954 = vmul.f32 %v896, %v780
        %v955 = vmul.f32 %v892, %v784
        %v956 = vmul.f32 %v896, %v784
        %v957 = vmul.f32 %v892, %v788
        %v958 = vmul.f32 %v896, %v788
        %v959 = vmul.f32 %v892, %v792
        %v960 = vmul.f32 %v896, %v792
        %v961 = vmul.f32 %v900, %v780
        %v962 = vmul.f32 %v904, %v780
        %v963 = vmul.f32 %v900, %v784
        %v964 = vmul.f32 %v904, %v784
        %v965 = vmul.f32 %v900, %v788
        %v966 = vmul.f32 %v904, %v788
        %v967 = vmul.f32 %v900, %v792
        %v968 = vmul.f32 %v904, %v792
        %v969 = vmul.f32 %v908, %v780
        %v970 = vmul.f32 %v912, %v780
        %v971 = vmul.f32 %v908, %v784
        %v972 = vmul.f32 %v912, %v784
        %v973 = vmul.f32 %v908, %v788
        %v974 = vmul.f32 %v912, %v788
        %v975 = vmul.f32 %v908, %v792
        %v976 = vmul.f32 %v912, %v792
        %v977 = vmul.f32 %v916, %v780
        %v978 = vmul.f32 %v920, %v780
        %v979 = vmul.f32 %v916, %v784
        %v980 = vmul.f32 %v920, %v784
        %v981 = vmul.f32 %v916, %v788
        %v982 = vmul.f32 %v920, %v788
        %v983 = vmul.f32 %v916, %v792
        %v984 = vmul.f32 %v920, %v792
        %v985 = vmul.f32 %v924, %v780
        %v986 = vmul.f32 %v928, %v780
        %v987 = vmul.f32 %v924, %v784
        %v988 = vmul.f32 %v928, %v784
        %v989 = vmul.f32 %v924, %v788
        %v990 = vmul.f32 %v928, %v788
        %v991 = vmul.f32 %v924, %v792
        %v992 = vmul.f32 %v928, %v792
        %v993 = vmul.f32 %v932, %v780
        %v994 = vmul.f32 %v936, %v780
        %v995 = vmul.f32 %v932, %v784
        %v996 = vmul.f32 %v936, %v784
        %v997 = vmul.f32 %v932, %v788
        %v998 = vmul.f32 %v936, %v788
        %v999 = vmul.f32 %v932, %v792
        %v1000 = vmul.f32 %v936, %v792
        %v1001 = vadd.f32 %v710, %v937
        %v1002 = vadd.f32 %v711, %v938
        %v1003 = vadd.f32 %v712, %v939
        %v1004 = vadd.f32 %v713, %v940
        %v1005 = vadd.f32 %v714, %v941
        %v1006 = vadd.f32 %v715, %v942
        %v1007 = vadd.f32 %v716, %v943
        %v1008 = vadd.f32 %v717, %v944
        %v1009 = vadd.f32 %v718, %v945
        %v1010 = vadd.f32 %v719, %v946
        %v1011 = vadd.f32 %v720, %v947
        %v1012 = vadd.f32 %v721, %v948
        %v1013 = vadd.f32 %v722, %v949
        %v1014 = vadd.f32 %v723, %v950
        %v1015 = vadd.f32 %v724, %v951
        %v1016 = vadd.f32 %v725, %v952
        %v1017 = vadd.f32 %v726, %v953
        %v1018 = vadd.f32 %v727, %v954
        %v1019 = vadd.f32 %v728, %v955
        %v1020 = vadd.f32 %v729, %v956
        %v1021 = vadd.f32 %v730, %v957
        %v1022 = vadd.f32 %v731, %v958
        %v1023 = vadd.f32 %v732, %v959
        %v1024 = vadd.f32 %v733, %v960
        %v1025 = vadd.f32 %v734, %v961
        %v1026 = vadd.f32 %v735, %v962
        %v1027 = vadd.f32 %v736, %v963
        %v1028 = vadd.f32 %v737, %v964
        %v1029 = vadd.f32 %v738, %v965
        %v1030 = vadd.f32 %v739, %v966
        %v1031 = vadd.f32 %v740, %v967
        %v1032 = vadd.f32 %v741, %v968
        %v1033 = vadd.f32 %v742, %v969
        %v1034 = vadd.f32 %v743, %v970
        %v1035 = vadd.f32 %v744, %v971
        %v1036 = vadd.f32 %v745, %v972
        %v1037 = vadd.f32 %v746, %v973
        %v1038 = vadd.f32 %v747, %v974
        %v1039 = vadd.f32 %v748, %v975
        %v1040 = vadd.f32 %v749, %v976
        %v1041 = vadd.f32 %v750, %v977
        %v1042 = vadd.f32 %v751, %v978
        %v1043 = vadd.f32 %v752, %v979
        %v1044 = vadd.f32 %v753, %v980
        %v1045 = vadd.f32 %v754, %v981
        %v1046 = vadd.f32 %v755, %v982
        %v1047 = vadd.f32 %v756, %v983
        %v1048 = vadd.f32 %v757, %v984
        %v1049 = vadd.f32 %v758, %v985
        %v1050 = vadd.f32 %v759, %v986
        %v1051 = vadd.f32 %v760, %v987
        %v1052 = vadd.f32 %v761, %v988
        %v1053 = vadd.f32 %v762, %v989
        %v1054 = vadd.f32 %v763, %v990
        %v1055 = vadd.f32 %v764, %v991
        %v1056 = vadd.f32 %v765, %v992
        %v1057 = vadd.f32 %v766, %v993
        %v1058 = vadd.f32 %v767, %v994
        %v1059 = vadd.f32 %v768, %v995
        %v1060 = vadd.f32 %v769, %v996
        %v1061 = vadd.f32 %v770, %v997
        %v1062 = vadd.f32 %v771, %v998
        %v1063 = vadd.f32 %v772, %v999
        %v1064 = vadd.f32 %v773, %v1000
        %v1065 = vmax.f32 %v1001, 0.0
        %v1066 = vmax.f32 %v1002, 0.0
        %v1067 = vmax.f32 %v1003, 0.0
        %v1068 = vmax.f32 %v1004, 0.0
        %v1069 = vmax.f32 %v1005, 0.0
        %v1070 = vmax.f32 %v1006, 0.0
        %v1071 = vmax.f32 %v1007, 0.0
        %v1072 = vmax.f32 %v1008, 0.0
        %v1073 = vmax.f32 %v1009, 0.0
        %v1074 = vmax.f32 %v1010, 0.0
        %v1075 = vmax.f32 %v1011, 0.0
        %v1076 = vmax.f32 %v1012, 0.0
        %v1077 = vmax.f32 %v1013, 0.0
        %v1078 = vmax.f32 %v1014, 0.0
        %v1079 = vmax.f32 %v1015, 0.0
        %v1080 = vmax.f32 %v1016, 0.0
        %v1081 = vmax.f32 %v1017, 0.0
        %v1082 = vmax.f32 %v1018, 0.0
        %v1083 = vmax.f32 %v1019, 0.0
        %v1084 = vmax.f32 %v1020, 0.0
        %v1085 = vmax.f32 %v1021, 0.0
        %v1086 = vmax.f32 %v1022, 0.0
        %v1087 = vmax.f32 %v1023, 0.0
        %v1088 = vmax.f32 %v1024, 0.0
        %v1089 = vmax.f32 %v1025, 0.0
        %v1090 = vmax.f32 %v1026, 0.0
        %v1091 = vmax.f32 %v1027, 0.0
        %v1092 = vmax.f32 %v1028, 0.0
        %v1093 = vmax.f32 %v1029, 0.0
        %v1094 = vmax.f32 %v1030, 0.0
        %v1095 = vmax.f32 %v1031, 0.0
        %v1096 = vmax.f32 %v1032, 0.0
        %v1097 = vmax.f32 %v1033, 0.0
        %v1098 = vmax.f32 %v1034, 0.0
        %v1099 = vmax.f32 %v1035, 0.0
        %v1100 = vmax.f32 %v1036, 0.0
        %v1101 = vmax.f32 %v1037, 0.0
        %v1102 = vmax.f32 %v1038, 0.0
        %v1103 = vmax.f32 %v1039, 0.0
        %v1104 = vmax.f32 %v1040, 0.0
        %v1105 = vmax.f32 %v1041, 0.0
        %v1106 = vmax.f32 %v1042, 0.0
        %v1107 = vmax.f32 %v1043, 0.0
        %v1108 = vmax.f32 %v1044, 0.0
        %v1109 = vmax.f32 %v1045, 0.0
        %v1110 = vmax.f32 %v1046, 0.0
        %v1111 = vmax.f32 %v1047, 0.0
        %v1112 = vmax.f32 %v1048, 0.0
        %v1113 = vmax.f32 %v1049, 0.0
        %v1114 = vmax.f32 %v1050, 0.0
        %v1115 = vmax.f32 %v1051, 0.0
        %v1116 = vmax.f32 %v1052, 0.0
        %v1117 = vmax.f32 %v1053, 0.0
        %v1118 = vmax.f32 %v1054, 0.0
        %v1119 = vmax.f32 %v1055, 0.0
        %v1120 = vmax.f32 %v1056, 0.0
        %v1121 = vmax.f32 %v1057, 0.0
        %v1122 = vmax.f32 %v1058, 0.0
        %v1123 = vmax.f32 %v1059, 0.0
        %v1124 = vmax.f32 %v1060, 0.0
        %v1125 = vmax.f32 %v1061, 0.0
        %v1126 = vmax.f32 %v1062, 0.0
        %v1127 = vmax.f32 %v1063, 0.0
        %v1128 = vmax.f32 %v1064, 0.0
        %v1129 = vadd.f32 %v1065, %v1066
        %1130 = vadd.xlane.f32.xlu0 %v1129
        %v1131 = vpop.xlane.xlu0 %1130
        %v1132 = vadd.f32 %v1067, %v1068
        %1133 = vadd.xlane.f32.xlu0 %v1132
        %v1134 = vpop.xlane.xlu0 %1133
        %v1135 = vadd.f32 %v1069, %v1070
        %1136 = vadd.xlane.f32.xlu0 %v1135
        %v1137 = vpop.xlane.xlu0 %1136
        %v1138 = vadd.f32 %v1071, %v1072
        %1139 = vadd.xlane.f32.xlu0 %v1138
        %v1140 = vpop.xlane.xlu0 %1139
        %v1141 = vadd.f32 %v1073, %v1074
        %1142 = vadd.xlane.f32.xlu0 %v1141
        %v1143 = vpop.xlane.xlu0 %1142
        %v1144 = vadd.f32 %v1075, %v1076
        %1145 = vadd.xlane.f32.xlu0 %v1144
        %v1146 = vpop.xlane.xlu0 %1145
        %v1147 = vadd.f32 %v1077, %v1078
        %1148 = vadd.xlane.f32.xlu0 %v1147
        %v1149 = vpop.xlane.xlu0 %1148
        %v1150 = vadd.f32 %v1079, %v1080
        %1151 = vadd.xlane.f32.xlu0 %v1150
        %v1152 = vpop.xlane.xlu0 %1151
        %v1153 = vadd.f32 %v1081, %v1082
        %1154 = vadd.xlane.f32.xlu0 %v1153
        %v1155 = vpop.xlane.xlu0 %1154
        %v1156 = vadd.f32 %v1083, %v1084
        %1157 = vadd.xlane.f32.xlu0 %v1156
        %v1158 = vpop.xlane.xlu0 %1157
        %v1159 = vadd.f32 %v1085, %v1086
        %1160 = vadd.xlane.f32.xlu0 %v1159
        %v1161 = vpop.xlane.xlu0 %1160
        %v1162 = vadd.f32 %v1087, %v1088
        %1163 = vadd.xlane.f32.xlu0 %v1162
        %v1164 = vpop.xlane.xlu0 %1163
        %v1165 = vadd.f32 %v1089, %v1090
        %1166 = vadd.xlane.f32.xlu0 %v1165
        %v1167 = vpop.xlane.xlu0 %1166
        %v1168 = vadd.f32 %v1091, %v1092
        %1169 = vadd.xlane.f32.xlu0 %v1168
        %v1170 = vpop.xlane.xlu0 %1169
        %v1171 = vadd.f32 %v1093, %v1094
        %1172 = vadd.xlane.f32.xlu0 %v1171
        %v1173 = vpop.xlane.xlu0 %1172
        %v1174 = vadd.f32 %v1095, %v1096
        %1175 = vadd.xlane.f32.xlu0 %v1174
        %v1176 = vpop.xlane.xlu0 %1175
        %v1177 = vadd.f32 %v1097, %v1098
        %1178 = vadd.xlane.f32.xlu0 %v1177
        %v1179 = vpop.xlane.xlu0 %1178
        %v1180 = vadd.f32 %v1099, %v1100
        %1181 = vadd.xlane.f32.xlu0 %v1180
        %v1182 = vpop.xlane.xlu0 %1181
        %v1183 = vadd.f32 %v1101, %v1102
        %1184 = vadd.xlane.f32.xlu0 %v1183
        %v1185 = vpop.xlane.xlu0 %1184
        %v1186 = vadd.f32 %v1103, %v1104
        %1187 = vadd.xlane.f32.xlu0 %v1186
        %v1188 = vpop.xlane.xlu0 %1187
        %v1189 = vadd.f32 %v1105, %v1106
        %1190 = vadd.xlane.f32.xlu0 %v1189
        %v1191 = vpop.xlane.xlu0 %1190
        %v1192 = vadd.f32 %v1107, %v1108
        %1193 = vadd.xlane.f32.xlu0 %v1192
        %v1194 = vpop.xlane.xlu0 %1193
        %v1195 = vadd.f32 %v1109, %v1110
        %1196 = vadd.xlane.f32.xlu0 %v1195
        %v1197 = vpop.xlane.xlu0 %1196
        %v1198 = vadd.f32 %v1111, %v1112
        %1199 = vadd.xlane.f32.xlu0 %v1198
        %v1200 = vpop.xlane.xlu0 %1199
        %v1201 = vadd.f32 %v1113, %v1114
        %1202 = vadd.xlane.f32.xlu0 %v1201
        %v1203 = vpop.xlane.xlu0 %1202
        %v1204 = vadd.f32 %v1115, %v1116
        %1205 = vadd.xlane.f32.xlu0 %v1204
        %v1206 = vpop.xlane.xlu0 %1205
        %v1207 = vadd.f32 %v1117, %v1118
        %1208 = vadd.xlane.f32.xlu0 %v1207
        %v1209 = vpop.xlane.xlu0 %1208
        %v1210 = vadd.f32 %v1119, %v1120
        %1211 = vadd.xlane.f32.xlu0 %v1210
        %v1212 = vpop.xlane.xlu0 %1211
        %v1213 = vadd.f32 %v1121, %v1122
        %1214 = vadd.xlane.f32.xlu0 %v1213
        %v1215 = vpop.xlane.xlu0 %1214
        %v1216 = vadd.f32 %v1123, %v1124
        %1217 = vadd.xlane.f32.xlu0 %v1216
        %v1218 = vpop.xlane.xlu0 %1217
        %v1219 = vadd.f32 %v1125, %v1126
        %1220 = vadd.xlane.f32.xlu0 %v1219
        %v1221 = vpop.xlane.xlu0 %1220
        %v1222 = vadd.f32 %v1127, %v1128
        %1223 = vadd.xlane.f32.xlu0 %v1222
        %v1224 = vpop.xlane.xlu0 %1223
        %v1225 = vrcp.pop 256.0
        %v1226 = vmul.f32 %v1131, %v1225
        %v1227 = vmul.f32 %v1134, %v1225
        %v1228 = vmul.f32 %v1137, %v1225
        %v1229 = vmul.f32 %v1140, %v1225
        %v1230 = vmul.f32 %v1143, %v1225
        %v1231 = vmul.f32 %v1146, %v1225
        %v1232 = vmul.f32 %v1149, %v1225
        %v1233 = vmul.f32 %v1152, %v1225
        %v1234 = vmul.f32 %v1155, %v1225
        %v1235 = vmul.f32 %v1158, %v1225
        %v1236 = vmul.f32 %v1161, %v1225
        %v1237 = vmul.f32 %v1164, %v1225
        %v1238 = vmul.f32 %v1167, %v1225
        %v1239 = vmul.f32 %v1170, %v1225
        %v1240 = vmul.f32 %v1173, %v1225
        %v1241 = vmul.f32 %v1176, %v1225
        %v1242 = vmul.f32 %v1179, %v1225
        %v1243 = vmul.f32 %v1182, %v1225
        %v1244 = vmul.f32 %v1185, %v1225
        %v1245 = vmul.f32 %v1188, %v1225
        %v1246 = vmul.f32 %v1191, %v1225
        %v1247 = vmul.f32 %v1194, %v1225
        %v1248 = vmul.f32 %v1197, %v1225
        %v1249 = vmul.f32 %v1200, %v1225
        %v1250 = vmul.f32 %v1203, %v1225
        %v1251 = vmul.f32 %v1206, %v1225
        %v1252 = vmul.f32 %v1209, %v1225
        %v1253 = vmul.f32 %v1212, %v1225
        %v1254 = vmul.f32 %v1215, %v1225
        %v1255 = vmul.f32 %v1218, %v1225
        %v1256 = vmul.f32 %v1221, %v1225
        %v1257 = vmul.f32 %v1224, %v1225
        %v1258 = vmax.f32 %v1065, %v1066
        %1259 = vmax.xlane.f32.xlu0 %v1258
        %v1260 = vpop.xlane.xlu0 %1259
        %v1261 = vmax.f32 %v1067, %v1068
        %1262 = vmax.xlane.f32.xlu0 %v1261
        %v1263 = vpop.xlane.xlu0 %1262
        %v1264 = vmax.f32 %v1069, %v1070
        %1265 = vmax.xlane.f32.xlu0 %v1264
        %v1266 = vpop.xlane.xlu0 %1265
        %v1267 = vmax.f32 %v1071, %v1072
        %1268 = vmax.xlane.f32.xlu0 %v1267
        %v1269 = vpop.xlane.xlu0 %1268
        %v1270 = vmax.f32 %v1073, %v1074
        %1271 = vmax.xlane.f32.xlu0 %v1270
        %v1272 = vpop.xlane.xlu0 %1271
        %v1273 = vmax.f32 %v1075, %v1076
        %1274 = vmax.xlane.f32.xlu0 %v1273
        %v1275 = vpop.xlane.xlu0 %1274
        %v1276 = vmax.f32 %v1077, %v1078
        %1277 = vmax.xlane.f32.xlu0 %v1276
        %v1278 = vpop.xlane.xlu0 %1277
        %v1279 = vmax.f32 %v1079, %v1080
        %1280 = vmax.xlane.f32.xlu0 %v1279
        %v1281 = vpop.xlane.xlu0 %1280
        %v1282 = vmax.f32 %v1081, %v1082
        %1283 = vmax.xlane.f32.xlu0 %v1282
        %v1284 = vpop.xlane.xlu0 %1283
        %v1285 = vmax.f32 %v1083, %v1084
        %1286 = vmax.xlane.f32.xlu0 %v1285
        %v1287 = vpop.xlane.xlu0 %1286
        %v1288 = vmax.f32 %v1085, %v1086
        %1289 = vmax.xlane.f32.xlu0 %v1288
        %v1290 = vpop.xlane.xlu0 %1289
        %v1291 = vmax.f32 %v1087, %v1088
        %1292 = vmax.xlane.f32.xlu0 %v1291
        %v1293 = vpop.xlane.xlu0 %1292
        %v1294 = vmax.f32 %v1089, %v1090
        %1295 = vmax.xlane.f32.xlu0 %v1294
        %v1296 = vpop.xlane.xlu0 %1295
        %v1297 = vmax.f32 %v1091, %v1092
        %1298 = vmax.xlane.f32.xlu0 %v1297
        %v1299 = vpop.xlane.xlu0 %1298
        %v1300 = vmax.f32 %v1093, %v1094
        %1301 = vmax.xlane.f32.xlu0 %v1300
        %v1302 = vpop.xlane.xlu0 %1301
        %v1303 = vmax.f32 %v1095, %v1096
        %1304 = vmax.xlane.f32.xlu0 %v1303
        %v1305 = vpop.xlane.xlu0 %1304
        %v1306 = vmax.f32 %v1097, %v1098
        %1307 = vmax.xlane.f32.xlu0 %v1306
        %v1308 = vpop.xlane.xlu0 %1307
        %v1309 = vmax.f32 %v1099, %v1100
        %1310 = vmax.xlane.f32.xlu0 %v1309
        %v1311 = vpop.xlane.xlu0 %1310
        %v1312 = vmax.f32 %v1101, %v1102
        %1313 = vmax.xlane.f32.xlu0 %v1312
        %v1314 = vpop.xlane.xlu0 %1313
        %v1315 = vmax.f32 %v1103, %v1104
        %1316 = vmax.xlane.f32.xlu0 %v1315
        %v1317 = vpop.xlane.xlu0 %1316
        %v1318 = vmax.f32 %v1105, %v1106
        %1319 = vmax.xlane.f32.xlu0 %v1318
        %v1320 = vpop.xlane.xlu0 %1319
        %v1321 = vmax.f32 %v1107, %v1108
        %1322 = vmax.xlane.f32.xlu0 %v1321
        %v1323 = vpop.xlane.xlu0 %1322
        %v1324 = vmax.f32 %v1109, %v1110
        %1325 = vmax.xlane.f32.xlu0 %v1324
        %v1326 = vpop.xlane.xlu0 %1325
        %v1327 = vmax.f32 %v1111, %v1112
        %1328 = vmax.xlane.f32.xlu0 %v1327
        %v1329 = vpop.xlane.xlu0 %1328
        %v1330 = vmax.f32 %v1113, %v1114
        %1331 = vmax.xlane.f32.xlu0 %v1330
        %v1332 = vpop.xlane.xlu0 %1331
        %v1333 = vmax.f32 %v1115, %v1116
        %1334 = vmax.xlane.f32.xlu0 %v1333
        %v1335 = vpop.xlane.xlu0 %1334
        %v1336 = vmax.f32 %v1117, %v1118
        %1337 = vmax.xlane.f32.xlu0 %v1336
        %v1338 = vpop.xlane.xlu0 %1337
        %v1339 = vmax.f32 %v1119, %v1120
        %1340 = vmax.xlane.f32.xlu0 %v1339
        %v1341 = vpop.xlane.xlu0 %1340
        %v1342 = vmax.f32 %v1121, %v1122
        %1343 = vmax.xlane.f32.xlu0 %v1342
        %v1344 = vpop.xlane.xlu0 %1343
        %v1345 = vmax.f32 %v1123, %v1124
        %1346 = vmax.xlane.f32.xlu0 %v1345
        %v1347 = vpop.xlane.xlu0 %1346
        %v1348 = vmax.f32 %v1125, %v1126
        %1349 = vmax.xlane.f32.xlu0 %v1348
        %v1350 = vpop.xlane.xlu0 %1349
        %v1351 = vmax.f32 %v1127, %v1128
        %1352 = vmax.xlane.f32.xlu0 %v1351
        %v1353 = vpop.xlane.xlu0 %1352
        %v1386 = vlaneseq
        %v1387 = vand.u32 %v1386, 127
        %v1388 = vlaneseq
        %v1389 = vshrl.u32 %v1388, 7
        %v1390 = vsub.s32 %v1387, %v1389
        %v1391 = vrot.slane %v1226, %v1390
        %v1392 = vadd.s32 %v1387, 4294967288
        %v1393 = vlaneseq
        %v1394 = vshrl.u32 %v1393, 7
        %v1395 = vsub.s32 %v1392, %v1394
        %v1396 = vrot.slane %v1227, %v1395
        %vm1397 = vcmask 130112
        %v1398 = vsel %vm1397, %v1396, %v1391
        %v1399 = vadd.s32 %v1387, 4294967280
        %v1400 = vlaneseq
        %v1401 = vshrl.u32 %v1400, 7
        %v1402 = vsub.s32 %v1399, %v1401
        %v1403 = vrot.slane %v1228, %v1402
        %vm1404 = vcmask 195712
        %v1405 = vsel %vm1404, %v1403, %v1398
        %v1406 = vadd.s32 %v1387, 4294967272
        %v1407 = vlaneseq
        %v1408 = vshrl.u32 %v1407, 7
        %v1409 = vsub.s32 %v1406, %v1408
        %v1410 = vrot.slane %v1229, %v1409
        %vm1411 = vcmask 261312
        %v1412 = vsel %vm1411, %v1410, %v1405
        %v1413 = vlaneseq
        %v1414 = vshrl.u32 %v1413, 7
        %v1415 = vsub.s32 %v1387, %v1414
        %v1416 = vrot.slane %v1230, %v1415
        %v1417 = vlaneseq
        %v1418 = vshrl.u32 %v1417, 7
        %v1419 = vsub.s32 %v1392, %v1418
        %v1420 = vrot.slane %v1231, %v1419
        %v1421 = vsel %vm1397, %v1420, %v1416
        %v1422 = vlaneseq
        %v1423 = vshrl.u32 %v1422, 7
        %v1424 = vsub.s32 %v1399, %v1423
        %v1425 = vrot.slane %v1232, %v1424
        %v1426 = vsel %vm1404, %v1425, %v1421
        %v1427 = vlaneseq
        %v1428 = vshrl.u32 %v1427, 7
        %v1429 = vsub.s32 %v1406, %v1428
        %v1430 = vrot.slane %v1233, %v1429
        %v1431 = vsel %vm1411, %v1430, %v1426
        %v1432 = vlaneseq
        %v1433 = vshrl.u32 %v1432, 7
        %v1434 = vsub.s32 %v1387, %v1433
        %v1435 = vrot.slane %v1234, %v1434
        %v1436 = vlaneseq
        %v1437 = vshrl.u32 %v1436, 7
        %v1438 = vsub.s32 %v1392, %v1437
        %v1439 = vrot.slane %v1235, %v1438
        %v1440 = vsel %vm1397, %v1439, %v1435
        %v1441 = vlaneseq
        %v1442 = vshrl.u32 %v1441, 7
        %v1443 = vsub.s32 %v1399, %v1442
        %v1444 = vrot.slane %v1236, %v1443
        %v1445 = vsel %vm1404, %v1444, %v1440
        %v1446 = vlaneseq
        %v1447 = vshrl.u32 %v1446, 7
        %v1448 = vsub.s32 %v1406, %v1447
        %v1449 = vrot.slane %v1237, %v1448
        %v1450 = vsel %vm1411, %v1449, %v1445
        %v1451 = vlaneseq
        %v1452 = vshrl.u32 %v1451, 7
        %v1453 = vsub.s32 %v1387, %v1452
        %v1454 = vrot.slane %v1238, %v1453
        %v1455 = vlaneseq
        %v1456 = vshrl.u32 %v1455, 7
        %v1457 = vsub.s32 %v1392, %v1456
        %v1458 = vrot.slane %v1239, %v1457
        %v1459 = vsel %vm1397, %v1458, %v1454
        %v1460 = vlaneseq
        %v1461 = vshrl.u32 %v1460, 7
        %v1462 = vsub.s32 %v1399, %v1461
        %v1463 = vrot.slane %v1240, %v1462
        %v1464 = vsel %vm1404, %v1463, %v1459
        %v1465 = vlaneseq
        %v1466 = vshrl.u32 %v1465, 7
        %v1467 = vsub.s32 %v1406, %v1466
        %v1468 = vrot.slane %v1241, %v1467
        %v1469 = vsel %vm1411, %v1468, %v1464
        %v1470 = vlaneseq
        %v1471 = vshrl.u32 %v1470, 7
        %v1472 = vsub.s32 %v1387, %v1471
        %v1473 = vrot.slane %v1242, %v1472
        %v1474 = vlaneseq
        %v1475 = vshrl.u32 %v1474, 7
        %v1476 = vsub.s32 %v1392, %v1475
        %v1477 = vrot.slane %v1243, %v1476
        %v1478 = vsel %vm1397, %v1477, %v1473
        %v1479 = vlaneseq
        %v1480 = vshrl.u32 %v1479, 7
        %v1481 = vsub.s32 %v1399, %v1480
        %v1482 = vrot.slane %v1244, %v1481
        %v1483 = vsel %vm1404, %v1482, %v1478
        %v1484 = vlaneseq
        %v1485 = vshrl.u32 %v1484, 7
        %v1486 = vsub.s32 %v1406, %v1485
        %v1487 = vrot.slane %v1245, %v1486
        %v1488 = vsel %vm1411, %v1487, %v1483
        %v1489 = vlaneseq
        %v1490 = vshrl.u32 %v1489, 7
        %v1491 = vsub.s32 %v1387, %v1490
        %v1492 = vrot.slane %v1246, %v1491
        %v1493 = vlaneseq
        %v1494 = vshrl.u32 %v1493, 7
        %v1495 = vsub.s32 %v1392, %v1494
        %v1496 = vrot.slane %v1247, %v1495
        %v1497 = vsel %vm1397, %v1496, %v1492
        %v1498 = vlaneseq
        %v1499 = vshrl.u32 %v1498, 7
        %v1500 = vsub.s32 %v1399, %v1499
        %v1501 = vrot.slane %v1248, %v1500
        %v1502 = vsel %vm1404, %v1501, %v1497
        %v1503 = vlaneseq
        %v1504 = vshrl.u32 %v1503, 7
        %v1505 = vsub.s32 %v1406, %v1504
        %v1506 = vrot.slane %v1249, %v1505
        %v1507 = vsel %vm1411, %v1506, %v1502
        %v1508 = vlaneseq
        %v1509 = vshrl.u32 %v1508, 7
        %v1510 = vsub.s32 %v1387, %v1509
        %v1511 = vrot.slane %v1250, %v1510
        %v1512 = vlaneseq
        %v1513 = vshrl.u32 %v1512, 7
        %v1514 = vsub.s32 %v1392, %v1513
        %v1515 = vrot.slane %v1251, %v1514
        %v1516 = vsel %vm1397, %v1515, %v1511
        %v1517 = vlaneseq
        %v1518 = vshrl.u32 %v1517, 7
        %v1519 = vsub.s32 %v1399, %v1518
        %v1520 = vrot.slane %v1252, %v1519
        %v1521 = vsel %vm1404, %v1520, %v1516
        %v1522 = vlaneseq
        %v1523 = vshrl.u32 %v1522, 7
        %v1524 = vsub.s32 %v1406, %v1523
        %v1525 = vrot.slane %v1253, %v1524
        %v1526 = vsel %vm1411, %v1525, %v1521
        %v1527 = vlaneseq
        %v1528 = vshrl.u32 %v1527, 7
        %v1529 = vsub.s32 %v1387, %v1528
        %v1530 = vrot.slane %v1254, %v1529
        %v1531 = vlaneseq
        %v1532 = vshrl.u32 %v1531, 7
        %v1533 = vsub.s32 %v1392, %v1532
        %v1534 = vrot.slane %v1255, %v1533
        %v1535 = vsel %vm1397, %v1534, %v1530
        %v1536 = vlaneseq
        %v1537 = vshrl.u32 %v1536, 7
        %v1538 = vsub.s32 %v1399, %v1537
        %v1539 = vrot.slane %v1256, %v1538
        %v1540 = vsel %vm1404, %v1539, %v1535
        %v1541 = vlaneseq
        %v1542 = vshrl.u32 %v1541, 7
        %v1543 = vsub.s32 %v1406, %v1542
        %v1544 = vrot.slane %v1257, %v1543
        %v1545 = vsel %vm1411, %v1544, %v1540
        %vm1546 = vcmask 1041409
        %v1547 = vsel %vm1546, %v1431, %v1412
        %vm1548 = vcmask 1042434
        %v1549 = vsel %vm1548, %v1450, %v1547
        %vm1550 = vcmask 1043459
        %v1551 = vsel %vm1550, %v1469, %v1549
        %vm1552 = vcmask 1044484
        %v1553 = vsel %vm1552, %v1488, %v1551
        %vm1554 = vcmask 1045509
        %v1555 = vsel %vm1554, %v1507, %v1553
        %vm1556 = vcmask 1046534
        %v1557 = vsel %vm1556, %v1526, %v1555
        %vm1558 = vcmask 1047559
        %v1559 = vsel %vm1558, %v1545, %v1557
        %v1593 = vadd.s32 %v1387, 4294967264
        %v1594 = vlaneseq
        %v1595 = vshrl.u32 %v1594, 7
        %v1596 = vsub.s32 %v1593, %v1595
        %v1597 = vrot.slane %v1260, %v1596
        %v1598 = vadd.s32 %v1387, 4294967256
        %v1599 = vlaneseq
        %v1600 = vshrl.u32 %v1599, 7
        %v1601 = vsub.s32 %v1598, %v1600
        %v1602 = vrot.slane %v1263, %v1601
        %vm1603 = vcmask 392512
        %v1604 = vsel %vm1603, %v1602, %v1597
        %v1605 = vadd.s32 %v1387, 4294967248
        %v1606 = vlaneseq
        %v1607 = vshrl.u32 %v1606, 7
        %v1608 = vsub.s32 %v1605, %v1607
        %v1609 = vrot.slane %v1266, %v1608
        %vm1610 = vcmask 458112
        %v1611 = vsel %vm1610, %v1609, %v1604
        %v1612 = vadd.s32 %v1387, 4294967240
        %v1613 = vlaneseq
        %v1614 = vshrl.u32 %v1613, 7
        %v1615 = vsub.s32 %v1612, %v1614
        %v1616 = vrot.slane %v1269, %v1615
        %vm1617 = vcmask 523712
        %v1618 = vsel %vm1617, %v1616, %v1611
        %v1619 = vlaneseq
        %v1620 = vshrl.u32 %v1619, 7
        %v1621 = vsub.s32 %v1593, %v1620
        %v1622 = vrot.slane %v1272, %v1621
        %v1623 = vlaneseq
        %v1624 = vshrl.u32 %v1623, 7
        %v1625 = vsub.s32 %v1598, %v1624
        %v1626 = vrot.slane %v1275, %v1625
        %v1627 = vsel %vm1603, %v1626, %v1622
        %v1628 = vlaneseq
        %v1629 = vshrl.u32 %v1628, 7
        %v1630 = vsub.s32 %v1605, %v1629
        %v1631 = vrot.slane %v1278, %v1630
        %v1632 = vsel %vm1610, %v1631, %v1627
        %v1633 = vlaneseq
        %v1634 = vshrl.u32 %v1633, 7
        %v1635 = vsub.s32 %v1612, %v1634
        %v1636 = vrot.slane %v1281, %v1635
        %v1637 = vsel %vm1617, %v1636, %v1632
        %v1638 = vlaneseq
        %v1639 = vshrl.u32 %v1638, 7
        %v1640 = vsub.s32 %v1593, %v1639
        %v1641 = vrot.slane %v1284, %v1640
        %v1642 = vlaneseq
        %v1643 = vshrl.u32 %v1642, 7
        %v1644 = vsub.s32 %v1598, %v1643
        %v1645 = vrot.slane %v1287, %v1644
        %v1646 = vsel %vm1603, %v1645, %v1641
        %v1647 = vlaneseq
        %v1648 = vshrl.u32 %v1647, 7
        %v1649 = vsub.s32 %v1605, %v1648
        %v1650 = vrot.slane %v1290, %v1649
        %v1651 = vsel %vm1610, %v1650, %v1646
        %v1652 = vlaneseq
        %v1653 = vshrl.u32 %v1652, 7
        %v1654 = vsub.s32 %v1612, %v1653
        %v1655 = vrot.slane %v1293, %v1654
        %v1656 = vsel %vm1617, %v1655, %v1651
        %v1657 = vlaneseq
        %v1658 = vshrl.u32 %v1657, 7
        %v1659 = vsub.s32 %v1593, %v1658
        %v1660 = vrot.slane %v1296, %v1659
        %v1661 = vlaneseq
        %v1662 = vshrl.u32 %v1661, 7
        %v1663 = vsub.s32 %v1598, %v1662
        %v1664 = vrot.slane %v1299, %v1663
        %v1665 = vsel %vm1603, %v1664, %v1660
        %v1666 = vlaneseq
        %v1667 = vshrl.u32 %v1666, 7
        %v1668 = vsub.s32 %v1605, %v1667
        %v1669 = vrot.slane %v1302, %v1668
        %v1670 = vsel %vm1610, %v1669, %v1665
        %v1671 = vlaneseq
        %v1672 = vshrl.u32 %v1671, 7
        %v1673 = vsub.s32 %v1612, %v1672
        %v1674 = vrot.slane %v1305, %v1673
        %v1675 = vsel %vm1617, %v1674, %v1670
        %v1676 = vlaneseq
        %v1677 = vshrl.u32 %v1676, 7
        %v1678 = vsub.s32 %v1593, %v1677
        %v1679 = vrot.slane %v1308, %v1678
        %v1680 = vlaneseq
        %v1681 = vshrl.u32 %v1680, 7
        %v1682 = vsub.s32 %v1598, %v1681
        %v1683 = vrot.slane %v1311, %v1682
        %v1684 = vsel %vm1603, %v1683, %v1679
        %v1685 = vlaneseq
        %v1686 = vshrl.u32 %v1685, 7
        %v1687 = vsub.s32 %v1605, %v1686
        %v1688 = vrot.slane %v1314, %v1687
        %v1689 = vsel %vm1610, %v1688, %v1684
        %v1690 = vlaneseq
        %v1691 = vshrl.u32 %v1690, 7
        %v1692 = vsub.s32 %v1612, %v1691
        %v1693 = vrot.slane %v1317, %v1692
        %v1694 = vsel %vm1617, %v1693, %v1689
        %v1695 = vlaneseq
        %v1696 = vshrl.u32 %v1695, 7
        %v1697 = vsub.s32 %v1593, %v1696
        %v1698 = vrot.slane %v1320, %v1697
        %v1699 = vlaneseq
        %v1700 = vshrl.u32 %v1699, 7
        %v1701 = vsub.s32 %v1598, %v1700
        %v1702 = vrot.slane %v1323, %v1701
        %v1703 = vsel %vm1603, %v1702, %v1698
        %v1704 = vlaneseq
        %v1705 = vshrl.u32 %v1704, 7
        %v1706 = vsub.s32 %v1605, %v1705
        %v1707 = vrot.slane %v1326, %v1706
        %v1708 = vsel %vm1610, %v1707, %v1703
        %v1709 = vlaneseq
        %v1710 = vshrl.u32 %v1709, 7
        %v1711 = vsub.s32 %v1612, %v1710
        %v1712 = vrot.slane %v1329, %v1711
        %v1713 = vsel %vm1617, %v1712, %v1708
        %v1714 = vlaneseq
        %v1715 = vshrl.u32 %v1714, 7
        %v1716 = vsub.s32 %v1593, %v1715
        %v1717 = vrot.slane %v1332, %v1716
        %v1718 = vlaneseq
        %v1719 = vshrl.u32 %v1718, 7
        %v1720 = vsub.s32 %v1598, %v1719
        %v1721 = vrot.slane %v1335, %v1720
        %v1722 = vsel %vm1603, %v1721, %v1717
        %v1723 = vlaneseq
        %v1724 = vshrl.u32 %v1723, 7
        %v1725 = vsub.s32 %v1605, %v1724
        %v1726 = vrot.slane %v1338, %v1725
        %v1727 = vsel %vm1610, %v1726, %v1722
        %v1728 = vlaneseq
        %v1729 = vshrl.u32 %v1728, 7
        %v1730 = vsub.s32 %v1612, %v1729
        %v1731 = vrot.slane %v1341, %v1730
        %v1732 = vsel %vm1617, %v1731, %v1727
        %v1733 = vlaneseq
        %v1734 = vshrl.u32 %v1733, 7
        %v1735 = vsub.s32 %v1593, %v1734
        %v1736 = vrot.slane %v1344, %v1735
        %v1737 = vlaneseq
        %v1738 = vshrl.u32 %v1737, 7
        %v1739 = vsub.s32 %v1598, %v1738
        %v1740 = vrot.slane %v1347, %v1739
        %v1741 = vsel %vm1603, %v1740, %v1736
        %v1742 = vlaneseq
        %v1743 = vshrl.u32 %v1742, 7
        %v1744 = vsub.s32 %v1605, %v1743
        %v1745 = vrot.slane %v1350, %v1744
        %v1746 = vsel %vm1610, %v1745, %v1741
        %v1747 = vlaneseq
        %v1748 = vshrl.u32 %v1747, 7
        %v1749 = vsub.s32 %v1612, %v1748
        %v1750 = vrot.slane %v1353, %v1749
        %v1751 = vsel %vm1617, %v1750, %v1746
        %v1752 = vsel %vm1546, %v1637, %v1618
        %v1753 = vsel %vm1548, %v1656, %v1752
        %v1754 = vsel %vm1550, %v1675, %v1753
        %v1755 = vsel %vm1552, %v1694, %v1754
        %v1756 = vsel %vm1554, %v1713, %v1755
        %v1757 = vsel %vm1556, %v1732, %v1756
        %v1758 = vsel %vm1558, %v1751, %v1757
        %vm1760 = vcmask 261120
        %v1761 = vsel %vm1760, %v1559, %v1758
        %vm1762 = vcmask 523264
        %v1763 = vsel %vm1762, %v1761, 0.0
        %1764 = vst [vmem:[%s231] sm:$0xff] %v1763
        %v1765 = vld [vmem:[%s2] sm:$0xff]
        %v1766 = vld [vmem:[%s2 + $0x8] sm:$0xff]
        %v1767 = vld [vmem:[%s2 + $0x10] sm:$0xff]
        %v1768 = vld [vmem:[%s2 + $0x18] sm:$0xff]
        %v1769 = vld [vmem:[%s2 + $0x20] sm:$0xff]
        %v1770 = vld [vmem:[%s2 + $0x28] sm:$0xff]
        %v1771 = vld [vmem:[%s2 + $0x30] sm:$0xff]
        %v1772 = vld [vmem:[%s2 + $0x38] sm:$0xff]
        %v1773 = vld [vmem:[%s3] sm:$0x1]
        %v1775 = vlaneseq
        %v1776 = vshrl.u32 %v1775, 7
        %v1777 = vsub.s32 0, %v1776
        %v1778 = vrot.slane %v1773, %v1777
        %v1781 = vsel %vm1762, %v1761, 0
        %1783 = vmatprep.subr.mxu0 0.0
        %1784 = vmatpush1.msra.mxu0 %v1765
        %1785 = vmatprep.subr.mxu0 0.0
        %1786 = vmatpush1.msra.mxu0 %v1766
        %1787 = vmatprep.subr.mxu0 0.0
        %1788 = vmatpush1.msra.mxu0 %v1767
        %1789 = vmatprep.subr.mxu0 0.0
        %1790 = vmatpush1.msra.mxu0 %v1768
        %1791 = vmatprep.subr.mxu0 0.0
        %1792 = vmatpush1.msra.mxu0 %v1769
        %1793 = vmatprep.subr.mxu0 0.0
        %1794 = vmatpush1.msra.mxu0 %v1770
        %1795 = vmatprep.subr.mxu0 0.0
        %1796 = vmatpush1.msra.mxu0 %v1771
        %1797 = vmatprep.subr.mxu0 0.0
        %1798 = vmatpush1.msra.mxu0 %v1772
        %1799 = vmatprep.subr.mxu0 0.0
        %1800 = vmatpush1.msra.mxu0 0.0
        %1801 = vmatprep.subr.mxu0 0.0
        %1802 = vmatpush1.msra.mxu0 0.0
        %1803 = vmatprep.subr.mxu0 0.0
        %1804 = vmatpush1.msra.mxu0 0.0
        %1805 = vmatprep.subr.mxu0 0.0
        %1806 = vmatpush1.msra.mxu0 0.0
        %1807 = vmatprep.subr.mxu0 0.0
        %1808 = vmatpush1.msra.mxu0 0.0
        %1809 = vmatprep.subr.mxu0 0.0
        %1810 = vmatpush1.msra.mxu0 0.0
        %1811 = vmatprep.subr.mxu0 0.0
        %1812 = vmatpush1.msra.mxu0 0.0
        %1813 = vmatprep.subr.mxu0 0.0
        %1814 = vmatpush1.msra.mxu0 0.0
        %1815 = vmatprep.subr.mxu0 0.0
        %1816 = vmatpush1.msra.mxu0 0.0
        %1817 = vmatprep.subr.mxu0 0.0
        %1818 = vmatpush1.msra.mxu0 0.0
        %1819 = vmatprep.subr.mxu0 0.0
        %1820 = vmatpush1.msra.mxu0 0.0
        %1821 = vmatprep.subr.mxu0 0.0
        %1822 = vmatpush1.msra.mxu0 0.0
        %1823 = vmatprep.subr.mxu0 0.0
        %1824 = vmatpush1.msra.mxu0 0.0
        %1825 = vmatprep.subr.mxu0 0.0
        %1826 = vmatpush1.msra.mxu0 0.0
        %1827 = vmatprep.subr.mxu0 0.0
        %1828 = vmatpush1.msra.mxu0 0.0
        %1829 = vmatprep.subr.mxu0 0.0
        %1830 = vmatpush1.msra.mxu0 0.0
        %1831 = vmatprep.subr.mxu0 0.0
        %1832 = vmatpush1.msra.mxu0 0.0
        %1833 = vmatprep.subr.mxu0 0.0
        %1834 = vmatpush1.msra.mxu0 0.0
        %1835 = vmatprep.subr.mxu0 0.0
        %1836 = vmatpush1.msra.mxu0 0.0
        %1837 = vmatprep.subr.mxu0 0.0
        %1838 = vmatpush1.msra.mxu0 0.0
        %1839 = vmatprep.subr.mxu0 0.0
        %1840 = vmatpush1.msra.mxu0 0.0
        %1841 = vmatprep.subr.mxu0 0.0
        %1842 = vmatpush1.msra.mxu0 0.0
        %1843 = vmatprep.subr.mxu0 0.0
        %1844 = vmatpush1.msra.mxu0 0.0
        %1845 = vmatprep.subr.mxu0 0.0
        %1846 = vmatpush1.msra.mxu0 0.0
        %1847 = vmatprep.mubr.f32.mxu0 0.0
        %1848 = vmatmul.mubr.f32.gmra.mrb[0].mxu0 %v1781
        %v1849 = vpop.f32.mrb[0].mxu0
        %v1850 = vadd.f32 %v1778, %v1849
        %v1851 = vpop.f32.mrb[0].mxu0
        %1852 = vdwg.mxu0
        %1853 = vst [vmem:[%s224] sm:$0xff] %v1850
        %s1854 = sand.u32 %s120, 1
        %s1855 = scalar_lea.sflag [#allocation3], %s1854
        %s1856 = sand.u32 %s120, 1
        %s1857 = smul.addr %s1856, 8
        %s1858 = scalar_lea.vmem [#allocation2], %s1857
        %s1859 = sand.u32 %s146, 1
        %s1860 = scalar_lea.sflag [#allocation5], %s1859
        %s1861 = sand.u32 %s146, 1
        %s1862 = smul.addr %s1861, 8
        %s1863 = scalar_lea.vmem [#allocation4], %s1862
        // Predicated region
        $region37: #{tpu_custom_call.1} parent=35 // pred_check
          %p1864 = pneg %p130
        $region38: #{tpu_custom_call.1} parent=35 // pred_check_branch
          %1866 = sbr.rel (%p1864) target = $region40
        $region39: #{tpu_custom_call.1} parent=35 // pred_region
          %s1868 = ssub.s32 128, 128
          %1869 = vsyncadd %s1855, %s1868
          %s1870 = smul.addr %s23, 128
          %s1871 = scalar_lea.hbm %s4, %s1870
          %s1873 = sshll.u32 %s1858, 4
          %s1874 = int_to_ptr.vmem [resolvable:$true] %s1873
          %1876 = dma.vmem_to_hbm [thread:$0]  %s1874, 128, %s1871, %s1855
        $region40: #{tpu_custom_call.1} parent=35 // pred_fallthru
          _
        // Predicated region
        $region41: #{tpu_custom_call.1} parent=35 // pred_check
          %p1877 = pneg %p156
        $region42: #{tpu_custom_call.1} parent=35 // pred_check_branch
          %1879 = sbr.rel (%p1877) target = $region44
        $region43: #{tpu_custom_call.1} parent=35 // pred_region
          %s1881 = ssub.s32 128, 128
          %1882 = vsyncadd %s1860, %s1881
          %s1883 = smul.addr %s23, 128
          %s1884 = scalar_lea.hbm %s5, %s1883
          %s1886 = sshll.u32 %s1863, 4
          %s1887 = int_to_ptr.vmem [resolvable:$true] %s1886
          %1889 = dma.vmem_to_hbm [thread:$0]  %s1887, 128, %s1884, %s1860
        $region44: #{tpu_custom_call.1} parent=35 // pred_fallthru
          _
      $region36: #{tpu_custom_call.1} parent=5 // pred_fallthru
        _
      %p1890 = scmp.le.s32.totalorder 2, %s18
      // Predicated region
      $region45: #{tpu_custom_call.1} parent=5 // pred_check
        %p1891 = pneg %p1890
      $region46: #{tpu_custom_call.1} parent=5 // pred_check_branch
        %1893 = sbr.rel (%p1891) target = $region48
      $region47: #{tpu_custom_call.1} parent=5 // pred_region
        %s1894 = ssub.s32 %s18, 2
        // Predicated region
        $region49: #{tpu_custom_call.1} parent=47 // pred_check
          %p1895 = pneg %p136
        $region50: #{tpu_custom_call.1} parent=47 // pred_check_branch
          %1897 = sbr.rel (%p1895) target = $region52
        $region51: #{tpu_custom_call.1} parent=47 // pred_region
          %s1898 = sand.u32 %s121, 1
          %s1899 = scalar_lea.sflag [#allocation3], %s1898
          %s1900 = sand.u32 %s121, 1
          %s1901 = smul.addr %s1900, 8
          %s1902 = scalar_lea.vmem [#allocation2], %s1901
          %1903 = dma.done %s1899, 128
        $region52: #{tpu_custom_call.1} parent=47 // pred_fallthru
          _
        // Predicated region
        $region53: #{tpu_custom_call.1} parent=47 // pred_check
          %p1904 = pneg %p162
        $region54: #{tpu_custom_call.1} parent=47 // pred_check_branch
          %1906 = sbr.rel (%p1904) target = $region56
        $region55: #{tpu_custom_call.1} parent=47 // pred_region
          %s1907 = sand.u32 %s147, 1
          %s1908 = scalar_lea.sflag [#allocation5], %s1907
          %s1909 = sand.u32 %s147, 1
          %s1910 = smul.addr %s1909, 8
          %s1911 = scalar_lea.vmem [#allocation4], %s1910
          %1912 = dma.done %s1908, 128
        $region56: #{tpu_custom_call.1} parent=47 // pred_fallthru
          _
      $region48: #{tpu_custom_call.1} parent=5 // pred_fallthru
        _
    $region6: #{tpu_custom_call.1} parent=1 // loop_footer
      %s22 = sadd.s32 1, %s18
    $region7: #{tpu_custom_call.1} parent=1 // loop_footer_branch
      %17 = sbr.rel target = $region3
    $region8: #{tpu_custom_call.1} parent=1 // loop_exit
      _
    %1913 = vsyncpa [#allocation3], 1
    %s1914 = scalar_lea.sflag [#allocation3], 1
    %1915 = vsyncpa %s1914, 1
    %1916 = vsyncpa [#allocation5], 1
    %s1917 = scalar_lea.sflag [#allocation5], 1
    %1918 = vsyncpa %s1917, 1

</llo_original>
